<compile_context>
chip_gen: v7x
topology: tpu7x:2x2x1
jax: 0.10.0
libtpu: 0.0.40
codegen_flags: <defaults>
</compile_context>

<pallas_src>
import functools

import jax
import jax.numpy as jnp
from jax import lax
from jax.experimental import pallas as pl
from jax.experimental.pallas import tpu as pltpu

HIDDEN = 128   # nn.LSTM(hidden_size=128, num_layers=3)
NLAYERS = 3


def rnn_simple_kernel(tstop_ref, lens_ref, x_ref,
                      wih0, whh0, b0,
                      wih1, whh1, b1,
                      wih2, whh2, b2,
                      wl, bl, wp,
                      emb_out, pred_out,
                      h_scr, c_scr, seq_scr, proj_scr,
                      *, loss_fn):
    """Whole forward pass for one (small) batch, entirely in VMEM.

    x_ref:    [T*Bp, D] bf16   time-major rows (rows t*Bp:(t+1)*Bp are timestep t)
    lens_ref: [Bp, 1] int32    valid lengths per (padded) batch row
    tstop_ref:[1] int32 SMEM   max(lens) -> recurrent loop bound
    wihL: [D_in, 4H] bf16, whhL: [H, 4H] bf16, bL: [1, 4H] f32 (bih+bhh, gate order i,f,g,o)
    wl: [H, spkr_dim] f32, bl: [1, spkr_dim] f32, wp: [spkr_dim, spkr_num] f32
    scratch: h_scr/c_scr [Bp, H] f32, seq_scr [T*Bp, H] f32, proj_scr [T*Bp, 4H] f32
    """
    Bp = h_scr.shape[0]
    t_stop = tstop_ref[0]
    lens = lens_ref[...]                                   # [Bp, 1] int32 (hoisted load)

    wih = (wih0, wih1, wih2)
    whh = (whh0, whh1, whh2)
    bias = (b0, b1, b2)

    # Rows >= max(len) are never written by the recurrent loops; keep them zero so the next
    # layer's full-T input projection sees zeros rather than stale VMEM.
    seq_scr[...] = jnp.zeros(seq_scr.shape, seq_scr.dtype)

    for l in range(NLAYERS):
        # ---- one big MXU matmul: input projection + bias for every timestep at once ----
        if l == 0:
            xin = x_ref[...]                               # [T*Bp, D] bf16
        else:
            xin = seq_scr[...].astype(jnp.bfloat16)        # previous layer output -> bf16 operand
        proj_scr[...] = (jnp.dot(xin, wih[l][...],
                                 preferred_element_type=jnp.float32)
                         + bias[l][...])                   # [T*Bp, 4H] f32

        # ---- recurrent part: only h @ whh remains on the serial path ----
        h_scr[...] = jnp.zeros(h_scr.shape, jnp.float32)   # hidden_init = None -> zeros
        c_scr[...] = jnp.zeros(c_scr.shape, jnp.float32)
        whh_l = whh[l][...]                                # hoist weight load out of the loop

        @pl.loop(0, t_stop)                                # bounded by max(len), not padded T
        def _(t):
            mask = jnp.broadcast_to(t < lens, (Bp, HIDDEN))    # single broadcast, reused 2x
            row = pl.multiple_of(t * Bp, 8)
            h = h_scr[...]                                 # [Bp, H] f32
            c = c_scr[...]
            gates = (proj_scr[pl.ds(row, Bp), :]
                     + jnp.dot(h.astype(jnp.bfloat16), whh_l,
                               preferred_element_type=jnp.float32))    # [Bp, 4H]
            i_g = jax.nn.sigmoid(gates[:, 0 * HIDDEN:1 * HIDDEN])
            f_g = jax.nn.sigmoid(gates[:, 1 * HIDDEN:2 * HIDDEN])
            g_g = jnp.tanh(gates[:, 2 * HIDDEN:3 * HIDDEN])
            o_g = jax.nn.sigmoid(gates[:, 3 * HIDDEN:4 * HIDDEN])
            c_new = f_g * c + i_g * g_g
            h_new = o_g * jnp.tanh(c_new)
            h_upd = jnp.where(mask, h_new, h)              # freeze state once past seq length
            c_upd = jnp.where(mask, c_new, c)
            h_scr[...] = h_upd
            c_scr[...] = c_upd
            if l < NLAYERS - 1:                            # last layer only needs final h
                seq_scr[pl.ds(row, Bp), :] = h_upd

    # ---- speaker head on hidden[-1] (final hidden state of the last layer) ----
    emb = jnp.dot(h_scr[...], wl[...], preferred_element_type=jnp.float32) + bl[...]

    if loss_fn == 'softmax':
        logits = jnp.dot(emb, wp[...], preferred_element_type=jnp.float32)
        m = jnp.max(logits, axis=-1, keepdims=True)
        e = jnp.exp(logits - m)
        pred = e * pl.reciprocal(jnp.sum(e, axis=-1, keepdims=True), approx=True)
    elif loss_fn == 'amsoftmax':
        ssq = jnp.sum(emb * emb, axis=-1, keepdims=True)
        emb = emb * lax.rsqrt(jnp.maximum(ssq, 1e-24))     # == F.normalize(p=2, eps=1e-12)
        pred = jnp.dot(emb, wp[...], preferred_element_type=jnp.float32)
    else:
        raise NotImplementedError(loss_fn)

    emb_out[...] = emb
    pred_out[...] = pred


def rnn_simple_forward(params, input_feat, input_len, loss_fn='softmax'):
    """input_feat: [B, T, D] float32 (already squeezed), input_len: [B] int (descending)."""
    B, T, D = input_feat.shape
    Bp = 8                                                 # pad batch to the f32 sublane multiple
    # TODO(synk): for serving throughput, batch more utterances per call (Bp -> 64-128) to fill
    #             the MXU M dim, and add a 'parallel' batch grid axis for v7x's second TC.
    spkr_dim = params['wl'].shape[0]
    spkr_num = params['wp'].shape[0]

    lens = jnp.zeros((Bp, 1), jnp.int32).at[:B, 0].set(jnp.asarray(input_len, jnp.int32))
    t_stop = jnp.max(lens).reshape(1)                      # recurrent loop bound = max(len)

    x = jnp.zeros((Bp, T, D), jnp.float32).at[:B].set(input_feat.astype(jnp.float32))
    x = jnp.transpose(x, (1, 0, 2)).reshape(T * Bp, D).astype(jnp.bfloat16)   # time-major rows

    args = [t_stop, lens, x]
    for l in range(NLAYERS):
        args.append(jnp.transpose(params[f'wih{l}']).astype(jnp.bfloat16))    # [D_in, 4H]
        args.append(jnp.transpose(params[f'whh{l}']).astype(jnp.bfloat16))    # [H, 4H]
        args.append((params[f'bih{l}'] + params[f'bhh{l}'])
                    .reshape(1, 4 * HIDDEN).astype(jnp.float32))
    args.append(jnp.transpose(params['wl']).astype(jnp.float32))              # [H, spkr_dim]
    args.append(params['bl'].reshape(1, spkr_dim).astype(jnp.float32))
    args.append(jnp.transpose(params['wp']).astype(jnp.float32))              # [spkr_dim, spkr_num]
    # TODO(synk): for large T / spkr_num, stream x and wp from HBM (memory_space=pl.ANY +
    #             double-buffered DMA, or a grid axis tiling spkr_num in 128-lane chunks)
    #             instead of holding everything resident in VMEM; trivial at these toy shapes.

    smem_spec = pl.BlockSpec(memory_space=pltpu.MemorySpace.SMEM)
    vspec = pl.BlockSpec(memory_space=pltpu.MemorySpace.VMEM)
    kernel = functools.partial(rnn_simple_kernel, loss_fn=loss_fn)

    emb, pred = pl.pallas_call(
        kernel,
        out_shape=(jax.ShapeDtypeStruct((Bp, spkr_dim), jnp.float32),
                   jax.ShapeDtypeStruct((Bp, spkr_num), jnp.float32)),
        in_specs=[smem_spec] + [vspec] * (len(args) - 1),
        out_specs=(vspec, vspec),
        scratch_shapes=[pltpu.VMEM((Bp, HIDDEN), jnp.float32),          # h
                        pltpu.VMEM((Bp, HIDDEN), jnp.float32),          # c
                        pltpu.VMEM((T * Bp, HIDDEN), jnp.float32),      # layer output sequence
                        pltpu.VMEM((T * Bp, 4 * HIDDEN), jnp.float32)], # precomputed projections
    )(*args)
    # spkr_embedding.view(B, -1), spkr_pred.view(B, -1)
    return emb[:B], pred[:B]


def make_params(key, input_dim, spkr_dim, spkr_num):
    """Deterministic synthetic parameters, shaped like the PyTorch module's."""
    ks = jax.random.split(key, 4 * NLAYERS + 3)
    kh = 1.0 / jnp.sqrt(HIDDEN)
    params = {}
    in_dims = [input_dim, HIDDEN, HIDDEN]
    idx = 0
    for l in range(NLAYERS):
        params[f'wih{l}'] = jax.random.uniform(ks[idx], (4 * HIDDEN, in_dims[l]),
                                               jnp.float32, -kh, kh); idx += 1
        params[f'whh{l}'] = jax.random.uniform(ks[idx], (4 * HIDDEN, HIDDEN),
                                               jnp.float32, -kh, kh); idx += 1
        params[f'bih{l}'] = jax.random.uniform(ks[idx], (4 * HIDDEN,),
                                               jnp.float32, -kh, kh); idx += 1
        params[f'bhh{l}'] = jax.random.uniform(ks[idx], (4 * HIDDEN,),
                                               jnp.float32, -kh, kh); idx += 1
    params['wl'] = jax.random.uniform(ks[idx], (spkr_dim, HIDDEN),
                                      jnp.float32, -kh, kh); idx += 1
    params['bl'] = jax.random.uniform(ks[idx], (spkr_dim,),
                                      jnp.float32, -kh, kh); idx += 1
    kp = 1.0 / jnp.sqrt(spkr_dim)
    params['wp'] = jax.random.uniform(ks[idx], (spkr_num, spkr_dim),
                                      jnp.float32, -kp, kp)
    return params


def reference_forward(params, input_feat, input_len, loss_fn):
    """Pure-JAX f32 reference matching PyTorch packed-LSTM forward semantics."""
    B, T, _ = input_feat.shape
    lens = jnp.asarray(input_len, jnp.int32)
    h = [jnp.zeros((B, HIDDEN), jnp.float32) for _ in range(NLAYERS)]
    c = [jnp.zeros((B, HIDDEN), jnp.float32) for _ in range(NLAYERS)]
    for t in range(T):
        mask = (t < lens)[:, None]
        inp = input_feat[:, t, :]
        for l in range(NLAYERS):
            b = params[f'bih{l}'] + params[f'bhh{l}']
            gates = inp @ params[f'wih{l}'].T + h[l] @ params[f'whh{l}'].T + b
            i_g = jax.nn.sigmoid(gates[:, :HIDDEN])
            f_g = jax.nn.sigmoid(gates[:, HIDDEN:2 * HIDDEN])
            g_g = jnp.tanh(gates[:, 2 * HIDDEN:3 * HIDDEN])
            o_g = jax.nn.sigmoid(gates[:, 3 * HIDDEN:])
            c_new = f_g * c[l] + i_g * g_g
            h_new = o_g * jnp.tanh(c_new)
            h[l] = jnp.where(mask, h_new, h[l])
            c[l] = jnp.where(mask, c_new, c[l])
            inp = h[l]
    emb = h[-1] @ params['wl'].T + params['bl']
    if loss_fn == 'softmax':
        pred = jax.nn.softmax(emb @ params['wp'].T, axis=-1)
    else:
        emb = emb / jnp.maximum(jnp.linalg.norm(emb, axis=-1, keepdims=True), 1e-12)
        pred = emb @ params['wp'].T
    return emb, pred


if __name__ == "__main__":
    # Small shapes consistent with the module: B=2, T=8 frames, input_dim=64,
    # spkr_dim=32, spkr_num=16. input_len must be descending (pack_padded_sequence).
    B, T, D = 2, 8, 64
    SPKR_DIM, SPKR_NUM = 32, 16

    key = jax.random.PRNGKey(0)
    k_param, k_feat = jax.random.split(key)
    params = make_params(k_param, D, SPKR_DIM, SPKR_NUM)
    input_feat = jax.random.normal(k_feat, (B, T, D), jnp.float32)
    input_len = jnp.array([8, 5], jnp.int32)

    ok = True
    for loss_fn in ('softmax', 'amsoftmax'):
        emb, pred = rnn_simple_forward(params, input_feat, input_len, loss_fn)
        jax.block_until_ready((emb, pred))
        emb_ref, pred_ref = reference_forward(params, input_feat, input_len, loss_fn)
        # tolerance loosened vs f32 reference because LSTM matmul operands are bf16 on the MXU
        ok &= bool(jnp.allclose(emb, emb_ref, atol=1e-2, rtol=1e-2))
        ok &= bool(jnp.allclose(pred, pred_ref, atol=1e-2, rtol=1e-2))

    if ok:
        print("KERNEL_OK")
    else:
        print("MISMATCH")
</pallas_src>

<mosaic_0001>
module attributes {stable_mosaic.version = 11 : i64} {
  func.func @rnn_simple_kernel(%arg0: memref<1xi32, #tpu.memory_space<smem>>, %arg1: memref<8x1xi32, #tpu.memory_space<vmem>>, %arg2: memref<64x64xbf16, #tpu.memory_space<vmem>>, %arg3: memref<64x512xbf16, #tpu.memory_space<vmem>>, %arg4: memref<128x512xbf16, #tpu.memory_space<vmem>>, %arg5: memref<1x512xf32, #tpu.memory_space<vmem>>, %arg6: memref<128x512xbf16, #tpu.memory_space<vmem>>, %arg7: memref<128x512xbf16, #tpu.memory_space<vmem>>, %arg8: memref<1x512xf32, #tpu.memory_space<vmem>>, %arg9: memref<128x512xbf16, #tpu.memory_space<vmem>>, %arg10: memref<128x512xbf16, #tpu.memory_space<vmem>>, %arg11: memref<1x512xf32, #tpu.memory_space<vmem>>, %arg12: memref<128x32xf32, #tpu.memory_space<vmem>>, %arg13: memref<1x32xf32, #tpu.memory_space<vmem>>, %arg14: memref<32x16xf32, #tpu.memory_space<vmem>>, %arg15: memref<8x32xf32, #tpu.memory_space<vmem>>, %arg16: memref<8x16xf32, #tpu.memory_space<vmem>>, %arg17: memref<8x128xf32, #tpu.memory_space<vmem>>, %arg18: memref<8x128xf32, #tpu.memory_space<vmem>>, %arg19: memref<64x128xf32, #tpu.memory_space<vmem>>, %arg20: memref<64x512xf32, #tpu.memory_space<vmem>>) attributes {dimension_semantics = [], scalar_prefetch = 0 : i64, scratch_operands = 4 : i64, tpu.core_type = #tpu.core_type<tc>} {
    %c0 = arith.constant 0 : index
    %0 = memref.load %arg0[%c0] : memref<1xi32, #tpu.memory_space<smem>>
    %c0_0 = arith.constant 0 : index
    %c0_1 = arith.constant 0 : index
    %1 = vector.load %arg1[%c0_0, %c0_1] : memref<8x1xi32, #tpu.memory_space<vmem>>, vector<8x1xi32>
    %cst = arith.constant 0.000000e+00 : f32
    %2 = vector.broadcast %cst : f32 to vector<64x128xf32>
    %c0_2 = arith.constant 0 : index
    %c0_3 = arith.constant 0 : index
    %3 = vector.load %arg19[%c0_2, %c0_3] : memref<64x128xf32, #tpu.memory_space<vmem>>, vector<64x128xf32>
    tpu.vector_store %arg19[%c0_2, %c0_3], %2 {strides = array<i32>} : memref<64x128xf32, #tpu.memory_space<vmem>>, vector<64x128xf32>,
    %c0_4 = arith.constant 0 : index
    %c0_5 = arith.constant 0 : index
    %4 = vector.load %arg2[%c0_4, %c0_5] : memref<64x64xbf16, #tpu.memory_space<vmem>>, vector<64x64xbf16>
    %c0_6 = arith.constant 0 : index
    %c0_7 = arith.constant 0 : index
    %5 = vector.load %arg3[%c0_6, %c0_7] : memref<64x512xbf16, #tpu.memory_space<vmem>>, vector<64x512xbf16>
    %cst_8 = arith.constant dense<0.000000e+00> : vector<64x512xf32>
    %6 = tpu.matmul %4, %5, %cst_8 {dimension_numbers = #tpu.dot_dimension_numbers<[1], [0], [0], [1], [0, 0, 1, 1], [], []>} : vector<64x64xbf16>, vector<64x512xbf16>, vector<64x512xf32> -> vector<64x512xf32>
    %c0_9 = arith.constant 0 : index
    %c0_10 = arith.constant 0 : index
    %7 = vector.load %arg5[%c0_9, %c0_10] : memref<1x512xf32, #tpu.memory_space<vmem>>, vector<1x512xf32>
    %8 = vector.broadcast %7 : vector<1x512xf32> to vector<64x512xf32>
    %9 = arith.addf %6, %8 : vector<64x512xf32>
    %c0_11 = arith.constant 0 : index
    %c0_12 = arith.constant 0 : index
    %10 = vector.load %arg20[%c0_11, %c0_12] : memref<64x512xf32, #tpu.memory_space<vmem>>, vector<64x512xf32>
    tpu.vector_store %arg20[%c0_11, %c0_12], %9 {strides = array<i32>} : memref<64x512xf32, #tpu.memory_space<vmem>>, vector<64x512xf32>,
    %cst_13 = arith.constant 0.000000e+00 : f32
    %11 = vector.broadcast %cst_13 : f32 to vector<8x128xf32>
    %c0_14 = arith.constant 0 : index
    %c0_15 = arith.constant 0 : index
    %12 = vector.load %arg17[%c0_14, %c0_15] : memref<8x128xf32, #tpu.memory_space<vmem>>, vector<8x128xf32>
    tpu.vector_store %arg17[%c0_14, %c0_15], %11 {strides = array<i32>} : memref<8x128xf32, #tpu.memory_space<vmem>>, vector<8x128xf32>,
    %cst_16 = arith.constant 0.000000e+00 : f32
    %13 = vector.broadcast %cst_16 : f32 to vector<8x128xf32>
    %c0_17 = arith.constant 0 : index
    %c0_18 = arith.constant 0 : index
    %14 = vector.load %arg18[%c0_17, %c0_18] : memref<8x128xf32, #tpu.memory_space<vmem>>, vector<8x128xf32>
    tpu.vector_store %arg18[%c0_17, %c0_18], %13 {strides = array<i32>} : memref<8x128xf32, #tpu.memory_space<vmem>>, vector<8x128xf32>,
    %c0_19 = arith.constant 0 : index
    %c0_20 = arith.constant 0 : index
    %15 = vector.load %arg4[%c0_19, %c0_20] : memref<128x512xbf16, #tpu.memory_space<vmem>>, vector<128x512xbf16>
    %c0_i32 = arith.constant 0 : i32
    %16 = arith.subi %0, %c0_i32 : i32
    %c1_i32 = arith.constant 1 : i32
    %c1_i32_21 = arith.constant 1 : i32
    %17 = arith.subi %c1_i32, %c1_i32_21 : i32
    %18 = arith.addi %16, %17 : i32
    %c1_i32_22 = arith.constant 1 : i32
    %19 = arith.divsi %18, %c1_i32_22 : i32
    %c1_i32_23 = arith.constant 1 : i32
    %c0_i32_24 = arith.constant 0 : i32
    %c0_i32_25 = arith.constant 0 : i32
    %20 = arith.subi %19, %c0_i32_25 : i32
    %21 = arith.addi %c0_i32_25, %20 : i32
    %c1_i32_26 = arith.constant 1 : i32
    scf.for %arg21 = %c0_i32_25 to %21 step %c1_i32_26  : i32 {
      %80 = arith.muli %arg21, %c1_i32_23 : i32
      %81 = arith.addi %c0_i32_24, %80 : i32
      %82 = vector.broadcast %81 : i32 to vector<8x1xi32>
      %83 = arith.cmpi slt, %82, %1 : vector<8x1xi32>
      %84 = vector.shape_cast %83 : vector<8x1xi1> to vector<8x1xi1>
      %85 = vector.broadcast %84 : vector<8x1xi1> to vector<8x128xi1>
      %c8_i32 = arith.constant 8 : i32
      %86 = arith.muli %81, %c8_i32 : i32
      %87 = tpu.assume_multiple %86, 8 : i32
      %c0_93 = arith.constant 0 : index
      %c0_94 = arith.constant 0 : index
      %88 = vector.load %arg17[%c0_93, %c0_94] : memref<8x128xf32, #tpu.memory_space<vmem>>, vector<8x128xf32>
      %c0_95 = arith.constant 0 : index
      %c0_96 = arith.constant 0 : index
      %89 = vector.load %arg18[%c0_95, %c0_96] : memref<8x128xf32, #tpu.memory_space<vmem>>, vector<8x128xf32>
      %90 = arith.index_cast %87 : i32 to index
      %c0_97 = arith.constant 0 : index
      %91 = vector.load %arg20[%90, %c0_97] : memref<64x512xf32, #tpu.memory_space<vmem>>, vector<8x512xf32>
      %92 = arith.truncf %88 : vector<8x128xf32> to vector<8x128xbf16>
      %cst_98 = arith.constant dense<0.000000e+00> : vector<8x512xf32>
      %93 = tpu.matmul %92, %15, %cst_98 {dimension_numbers = #tpu.dot_dimension_numbers<[1], [0], [0], [1], [0, 0, 1, 1], [], []>} : vector<8x128xbf16>, vector<128x512xbf16>, vector<8x512xf32> -> vector<8x512xf32>
      %94 = arith.addf %91, %93 : vector<8x512xf32>
      %95 = vector.extract_strided_slice %94 {offsets = [0, 0], sizes = [8, 128], strides = [1, 1]} : vector<8x512xf32> to vector<8x128xf32>
      %96 = arith.negf %95 : vector<8x128xf32>
      %97 = math.exp %96 : vector<8x128xf32>
      %cst_99 = arith.constant 1.000000e+00 : f32
      %98 = vector.broadcast %cst_99 : f32 to vector<8x128xf32>
      %99 = arith.addf %98, %97 : vector<8x128xf32>
      %100 = arith.divf %98, %99 : vector<8x128xf32>
      %101 = vector.extract_strided_slice %94 {offsets = [0, 128], sizes = [8, 128], strides = [1, 1]} : vector<8x512xf32> to vector<8x128xf32>
      %102 = arith.negf %101 : vector<8x128xf32>
      %103 = math.exp %102 : vector<8x128xf32>
      %cst_100 = arith.constant 1.000000e+00 : f32
      %104 = vector.broadcast %cst_100 : f32 to vector<8x128xf32>
      %105 = arith.addf %104, %103 : vector<8x128xf32>
      %106 = arith.divf %104, %105 : vector<8x128xf32>
      %107 = vector.extract_strided_slice %94 {offsets = [0, 256], sizes = [8, 128], strides = [1, 1]} : vector<8x512xf32> to vector<8x128xf32>
      %108 = math.tanh %107 : vector<8x128xf32>
      %109 = vector.extract_strided_slice %94 {offsets = [0, 384], sizes = [8, 128], strides = [1, 1]} : vector<8x512xf32> to vector<8x128xf32>
      %110 = arith.negf %109 : vector<8x128xf32>
      %111 = math.exp %110 : vector<8x128xf32>
      %cst_101 = arith.constant 1.000000e+00 : f32
      %112 = vector.broadcast %cst_101 : f32 to vector<8x128xf32>
      %113 = arith.addf %112, %111 : vector<8x128xf32>
      %114 = arith.divf %112, %113 : vector<8x128xf32>
      %115 = arith.mulf %106, %89 : vector<8x128xf32>
      %116 = arith.mulf %100, %108 : vector<8x128xf32>
      %117 = arith.addf %115, %116 : vector<8x128xf32>
      %118 = math.tanh %117 : vector<8x128xf32>
      %119 = arith.mulf %114, %118 : vector<8x128xf32>
      %120 = arith.select %85, %119, %88 : vector<8x128xi1>, vector<8x128xf32>
      %121 = arith.select %85, %117, %89 : vector<8x128xi1>, vector<8x128xf32>
      %c0_102 = arith.constant 0 : index
      %c0_103 = arith.constant 0 : index
      %122 = vector.load %arg17[%c0_102, %c0_103] : memref<8x128xf32, #tpu.memory_space<vmem>>, vector<8x128xf32>
      tpu.vector_store %arg17[%c0_102, %c0_103], %120 {strides = array<i32>} : memref<8x128xf32, #tpu.memory_space<vmem>>, vector<8x128xf32>,
      %c0_104 = arith.constant 0 : index
      %c0_105 = arith.constant 0 : index
      %123 = vector.load %arg18[%c0_104, %c0_105] : memref<8x128xf32, #tpu.memory_space<vmem>>, vector<8x128xf32>
      tpu.vector_store %arg18[%c0_104, %c0_105], %121 {strides = array<i32>} : memref<8x128xf32, #tpu.memory_space<vmem>>, vector<8x128xf32>,
      %124 = arith.index_cast %87 : i32 to index
      %c0_106 = arith.constant 0 : index
      %125 = vector.load %arg19[%124, %c0_106] : memref<64x128xf32, #tpu.memory_space<vmem>>, vector<8x128xf32>
      tpu.vector_store %arg19[%124, %c0_106], %120 {strides = array<i32>} : memref<64x128xf32, #tpu.memory_space<vmem>>, vector<8x128xf32>,
    }
    %c0_27 = arith.constant 0 : index
    %c0_28 = arith.constant 0 : index
    %22 = vector.load %arg19[%c0_27, %c0_28] : memref<64x128xf32, #tpu.memory_space<vmem>>, vector<64x128xf32>
    %23 = arith.truncf %22 : vector<64x128xf32> to vector<64x128xbf16>
    %c0_29 = arith.constant 0 : index
    %c0_30 = arith.constant 0 : index
    %24 = vector.load %arg6[%c0_29, %c0_30] : memref<128x512xbf16, #tpu.memory_space<vmem>>, vector<128x512xbf16>
    %cst_31 = arith.constant dense<0.000000e+00> : vector<64x512xf32>
    %25 = tpu.matmul %23, %24, %cst_31 {dimension_numbers = #tpu.dot_dimension_numbers<[1], [0], [0], [1], [0, 0, 1, 1], [], []>} : vector<64x128xbf16>, vector<128x512xbf16>, vector<64x512xf32> -> vector<64x512xf32>
    %c0_32 = arith.constant 0 : index
    %c0_33 = arith.constant 0 : index
    %26 = vector.load %arg8[%c0_32, %c0_33] : memref<1x512xf32, #tpu.memory_space<vmem>>, vector<1x512xf32>
    %27 = vector.broadcast %26 : vector<1x512xf32> to vector<64x512xf32>
    %28 = arith.addf %25, %27 : vector<64x512xf32>
    %c0_34 = arith.constant 0 : index
    %c0_35 = arith.constant 0 : index
    %29 = vector.load %arg20[%c0_34, %c0_35] : memref<64x512xf32, #tpu.memory_space<vmem>>, vector<64x512xf32>
    tpu.vector_store %arg20[%c0_34, %c0_35], %28 {strides = array<i32>} : memref<64x512xf32, #tpu.memory_space<vmem>>, vector<64x512xf32>,
    %cst_36 = arith.constant 0.000000e+00 : f32
    %30 = vector.broadcast %cst_36 : f32 to vector<8x128xf32>
    %c0_37 = arith.constant 0 : index
    %c0_38 = arith.constant 0 : index
    %31 = vector.load %arg17[%c0_37, %c0_38] : memref<8x128xf32, #tpu.memory_space<vmem>>, vector<8x128xf32>
    tpu.vector_store %arg17[%c0_37, %c0_38], %30 {strides = array<i32>} : memref<8x128xf32, #tpu.memory_space<vmem>>, vector<8x128xf32>,
    %cst_39 = arith.constant 0.000000e+00 : f32
    %32 = vector.broadcast %cst_39 : f32 to vector<8x128xf32>
    %c0_40 = arith.constant 0 : index
    %c0_41 = arith.constant 0 : index
    %33 = vector.load %arg18[%c0_40, %c0_41] : memref<8x128xf32, #tpu.memory_space<vmem>>, vector<8x128xf32>
    tpu.vector_store %arg18[%c0_40, %c0_41], %32 {strides = array<i32>} : memref<8x128xf32, #tpu.memory_space<vmem>>, vector<8x128xf32>,
    %c0_42 = arith.constant 0 : index
    %c0_43 = arith.constant 0 : index
    %34 = vector.load %arg7[%c0_42, %c0_43] : memref<128x512xbf16, #tpu.memory_space<vmem>>, vector<128x512xbf16>
    %c0_i32_44 = arith.constant 0 : i32
    %35 = arith.subi %0, %c0_i32_44 : i32
    %c1_i32_45 = arith.constant 1 : i32
    %c1_i32_46 = arith.constant 1 : i32
    %36 = arith.subi %c1_i32_45, %c1_i32_46 : i32
    %37 = arith.addi %35, %36 : i32
    %c1_i32_47 = arith.constant 1 : i32
    %38 = arith.divsi %37, %c1_i32_47 : i32
    %c1_i32_48 = arith.constant 1 : i32
    %c0_i32_49 = arith.constant 0 : i32
    %c0_i32_50 = arith.constant 0 : i32
    %39 = arith.subi %38, %c0_i32_50 : i32
    %40 = arith.addi %c0_i32_50, %39 : i32
    %c1_i32_51 = arith.constant 1 : i32
    scf.for %arg21 = %c0_i32_50 to %40 step %c1_i32_51  : i32 {
      %80 = arith.muli %arg21, %c1_i32_48 : i32
      %81 = arith.addi %c0_i32_49, %80 : i32
      %82 = vector.broadcast %81 : i32 to vector<8x1xi32>
      %83 = arith.cmpi slt, %82, %1 : vector<8x1xi32>
      %84 = vector.shape_cast %83 : vector<8x1xi1> to vector<8x1xi1>
      %85 = vector.broadcast %84 : vector<8x1xi1> to vector<8x128xi1>
      %c8_i32 = arith.constant 8 : i32
      %86 = arith.muli %81, %c8_i32 : i32
      %87 = tpu.assume_multiple %86, 8 : i32
      %c0_93 = arith.constant 0 : index
      %c0_94 = arith.constant 0 : index
      %88 = vector.load %arg17[%c0_93, %c0_94] : memref<8x128xf32, #tpu.memory_space<vmem>>, vector<8x128xf32>
      %c0_95 = arith.constant 0 : index
      %c0_96 = arith.constant 0 : index
      %89 = vector.load %arg18[%c0_95, %c0_96] : memref<8x128xf32, #tpu.memory_space<vmem>>, vector<8x128xf32>
      %90 = arith.index_cast %87 : i32 to index
      %c0_97 = arith.constant 0 : index
      %91 = vector.load %arg20[%90, %c0_97] : memref<64x512xf32, #tpu.memory_space<vmem>>, vector<8x512xf32>
      %92 = arith.truncf %88 : vector<8x128xf32> to vector<8x128xbf16>
      %cst_98 = arith.constant dense<0.000000e+00> : vector<8x512xf32>
      %93 = tpu.matmul %92, %34, %cst_98 {dimension_numbers = #tpu.dot_dimension_numbers<[1], [0], [0], [1], [0, 0, 1, 1], [], []>} : vector<8x128xbf16>, vector<128x512xbf16>, vector<8x512xf32> -> vector<8x512xf32>
      %94 = arith.addf %91, %93 : vector<8x512xf32>
      %95 = vector.extract_strided_slice %94 {offsets = [0, 0], sizes = [8, 128], strides = [1, 1]} : vector<8x512xf32> to vector<8x128xf32>
      %96 = arith.negf %95 : vector<8x128xf32>
      %97 = math.exp %96 : vector<8x128xf32>
      %cst_99 = arith.constant 1.000000e+00 : f32
      %98 = vector.broadcast %cst_99 : f32 to vector<8x128xf32>
      %99 = arith.addf %98, %97 : vector<8x128xf32>
      %100 = arith.divf %98, %99 : vector<8x128xf32>
      %101 = vector.extract_strided_slice %94 {offsets = [0, 128], sizes = [8, 128], strides = [1, 1]} : vector<8x512xf32> to vector<8x128xf32>
      %102 = arith.negf %101 : vector<8x128xf32>
      %103 = math.exp %102 : vector<8x128xf32>
      %cst_100 = arith.constant 1.000000e+00 : f32
      %104 = vector.broadcast %cst_100 : f32 to vector<8x128xf32>
      %105 = arith.addf %104, %103 : vector<8x128xf32>
      %106 = arith.divf %104, %105 : vector<8x128xf32>
      %107 = vector.extract_strided_slice %94 {offsets = [0, 256], sizes = [8, 128], strides = [1, 1]} : vector<8x512xf32> to vector<8x128xf32>
      %108 = math.tanh %107 : vector<8x128xf32>
      %109 = vector.extract_strided_slice %94 {offsets = [0, 384], sizes = [8, 128], strides = [1, 1]} : vector<8x512xf32> to vector<8x128xf32>
      %110 = arith.negf %109 : vector<8x128xf32>
      %111 = math.exp %110 : vector<8x128xf32>
      %cst_101 = arith.constant 1.000000e+00 : f32
      %112 = vector.broadcast %cst_101 : f32 to vector<8x128xf32>
      %113 = arith.addf %112, %111 : vector<8x128xf32>
      %114 = arith.divf %112, %113 : vector<8x128xf32>
      %115 = arith.mulf %106, %89 : vector<8x128xf32>
      %116 = arith.mulf %100, %108 : vector<8x128xf32>
      %117 = arith.addf %115, %116 : vector<8x128xf32>
      %118 = math.tanh %117 : vector<8x128xf32>
      %119 = arith.mulf %114, %118 : vector<8x128xf32>
      %120 = arith.select %85, %119, %88 : vector<8x128xi1>, vector<8x128xf32>
      %121 = arith.select %85, %117, %89 : vector<8x128xi1>, vector<8x128xf32>
      %c0_102 = arith.constant 0 : index
      %c0_103 = arith.constant 0 : index
      %122 = vector.load %arg17[%c0_102, %c0_103] : memref<8x128xf32, #tpu.memory_space<vmem>>, vector<8x128xf32>
      tpu.vector_store %arg17[%c0_102, %c0_103], %120 {strides = array<i32>} : memref<8x128xf32, #tpu.memory_space<vmem>>, vector<8x128xf32>,
      %c0_104 = arith.constant 0 : index
      %c0_105 = arith.constant 0 : index
      %123 = vector.load %arg18[%c0_104, %c0_105] : memref<8x128xf32, #tpu.memory_space<vmem>>, vector<8x128xf32>
      tpu.vector_store %arg18[%c0_104, %c0_105], %121 {strides = array<i32>} : memref<8x128xf32, #tpu.memory_space<vmem>>, vector<8x128xf32>,
      %124 = arith.index_cast %87 : i32 to index
      %c0_106 = arith.constant 0 : index
      %125 = vector.load %arg19[%124, %c0_106] : memref<64x128xf32, #tpu.memory_space<vmem>>, vector<8x128xf32>
      tpu.vector_store %arg19[%124, %c0_106], %120 {strides = array<i32>} : memref<64x128xf32, #tpu.memory_space<vmem>>, vector<8x128xf32>,
    }
    %c0_52 = arith.constant 0 : index
    %c0_53 = arith.constant 0 : index
    %41 = vector.load %arg19[%c0_52, %c0_53] : memref<64x128xf32, #tpu.memory_space<vmem>>, vector<64x128xf32>
    %42 = arith.truncf %41 : vector<64x128xf32> to vector<64x128xbf16>
    %c0_54 = arith.constant 0 : index
    %c0_55 = arith.constant 0 : index
    %43 = vector.load %arg9[%c0_54, %c0_55] : memref<128x512xbf16, #tpu.memory_space<vmem>>, vector<128x512xbf16>
    %cst_56 = arith.constant dense<0.000000e+00> : vector<64x512xf32>
    %44 = tpu.matmul %42, %43, %cst_56 {dimension_numbers = #tpu.dot_dimension_numbers<[1], [0], [0], [1], [0, 0, 1, 1], [], []>} : vector<64x128xbf16>, vector<128x512xbf16>, vector<64x512xf32> -> vector<64x512xf32>
    %c0_57 = arith.constant 0 : index
    %c0_58 = arith.constant 0 : index
    %45 = vector.load %arg11[%c0_57, %c0_58] : memref<1x512xf32, #tpu.memory_space<vmem>>, vector<1x512xf32>
    %46 = vector.broadcast %45 : vector<1x512xf32> to vector<64x512xf32>
    %47 = arith.addf %44, %46 : vector<64x512xf32>
    %c0_59 = arith.constant 0 : index
    %c0_60 = arith.constant 0 : index
    %48 = vector.load %arg20[%c0_59, %c0_60] : memref<64x512xf32, #tpu.memory_space<vmem>>, vector<64x512xf32>
    tpu.vector_store %arg20[%c0_59, %c0_60], %47 {strides = array<i32>} : memref<64x512xf32, #tpu.memory_space<vmem>>, vector<64x512xf32>,
    %cst_61 = arith.constant 0.000000e+00 : f32
    %49 = vector.broadcast %cst_61 : f32 to vector<8x128xf32>
    %c0_62 = arith.constant 0 : index
    %c0_63 = arith.constant 0 : index
    %50 = vector.load %arg17[%c0_62, %c0_63] : memref<8x128xf32, #tpu.memory_space<vmem>>, vector<8x128xf32>
    tpu.vector_store %arg17[%c0_62, %c0_63], %49 {strides = array<i32>} : memref<8x128xf32, #tpu.memory_space<vmem>>, vector<8x128xf32>,
    %cst_64 = arith.constant 0.000000e+00 : f32
    %51 = vector.broadcast %cst_64 : f32 to vector<8x128xf32>
    %c0_65 = arith.constant 0 : index
    %c0_66 = arith.constant 0 : index
    %52 = vector.load %arg18[%c0_65, %c0_66] : memref<8x128xf32, #tpu.memory_space<vmem>>, vector<8x128xf32>
    tpu.vector_store %arg18[%c0_65, %c0_66], %51 {strides = array<i32>} : memref<8x128xf32, #tpu.memory_space<vmem>>, vector<8x128xf32>,
    %c0_67 = arith.constant 0 : index
    %c0_68 = arith.constant 0 : index
    %53 = vector.load %arg10[%c0_67, %c0_68] : memref<128x512xbf16, #tpu.memory_space<vmem>>, vector<128x512xbf16>
    %c0_i32_69 = arith.constant 0 : i32
    %54 = arith.subi %0, %c0_i32_69 : i32
    %c1_i32_70 = arith.constant 1 : i32
    %c1_i32_71 = arith.constant 1 : i32
    %55 = arith.subi %c1_i32_70, %c1_i32_71 : i32
    %56 = arith.addi %54, %55 : i32
    %c1_i32_72 = arith.constant 1 : i32
    %57 = arith.divsi %56, %c1_i32_72 : i32
    %c1_i32_73 = arith.constant 1 : i32
    %c0_i32_74 = arith.constant 0 : i32
    %c0_i32_75 = arith.constant 0 : i32
    %58 = arith.subi %57, %c0_i32_75 : i32
    %59 = arith.addi %c0_i32_75, %58 : i32
    %c1_i32_76 = arith.constant 1 : i32
    scf.for %arg21 = %c0_i32_75 to %59 step %c1_i32_76  : i32 {
      %80 = arith.muli %arg21, %c1_i32_73 : i32
      %81 = arith.addi %c0_i32_74, %80 : i32
      %82 = vector.broadcast %81 : i32 to vector<8x1xi32>
      %83 = arith.cmpi slt, %82, %1 : vector<8x1xi32>
      %84 = vector.shape_cast %83 : vector<8x1xi1> to vector<8x1xi1>
      %85 = vector.broadcast %84 : vector<8x1xi1> to vector<8x128xi1>
      %c8_i32 = arith.constant 8 : i32
      %86 = arith.muli %81, %c8_i32 : i32
      %87 = tpu.assume_multiple %86, 8 : i32
      %c0_93 = arith.constant 0 : index
      %c0_94 = arith.constant 0 : index
      %88 = vector.load %arg17[%c0_93, %c0_94] : memref<8x128xf32, #tpu.memory_space<vmem>>, vector<8x128xf32>
      %c0_95 = arith.constant 0 : index
      %c0_96 = arith.constant 0 : index
      %89 = vector.load %arg18[%c0_95, %c0_96] : memref<8x128xf32, #tpu.memory_space<vmem>>, vector<8x128xf32>
      %90 = arith.index_cast %87 : i32 to index
      %c0_97 = arith.constant 0 : index
      %91 = vector.load %arg20[%90, %c0_97] : memref<64x512xf32, #tpu.memory_space<vmem>>, vector<8x512xf32>
      %92 = arith.truncf %88 : vector<8x128xf32> to vector<8x128xbf16>
      %cst_98 = arith.constant dense<0.000000e+00> : vector<8x512xf32>
      %93 = tpu.matmul %92, %53, %cst_98 {dimension_numbers = #tpu.dot_dimension_numbers<[1], [0], [0], [1], [0, 0, 1, 1], [], []>} : vector<8x128xbf16>, vector<128x512xbf16>, vector<8x512xf32> -> vector<8x512xf32>
      %94 = arith.addf %91, %93 : vector<8x512xf32>
      %95 = vector.extract_strided_slice %94 {offsets = [0, 0], sizes = [8, 128], strides = [1, 1]} : vector<8x512xf32> to vector<8x128xf32>
      %96 = arith.negf %95 : vector<8x128xf32>
      %97 = math.exp %96 : vector<8x128xf32>
      %cst_99 = arith.constant 1.000000e+00 : f32
      %98 = vector.broadcast %cst_99 : f32 to vector<8x128xf32>
      %99 = arith.addf %98, %97 : vector<8x128xf32>
      %100 = arith.divf %98, %99 : vector<8x128xf32>
      %101 = vector.extract_strided_slice %94 {offsets = [0, 128], sizes = [8, 128], strides = [1, 1]} : vector<8x512xf32> to vector<8x128xf32>
      %102 = arith.negf %101 : vector<8x128xf32>
      %103 = math.exp %102 : vector<8x128xf32>
      %cst_100 = arith.constant 1.000000e+00 : f32
      %104 = vector.broadcast %cst_100 : f32 to vector<8x128xf32>
      %105 = arith.addf %104, %103 : vector<8x128xf32>
      %106 = arith.divf %104, %105 : vector<8x128xf32>
      %107 = vector.extract_strided_slice %94 {offsets = [0, 256], sizes = [8, 128], strides = [1, 1]} : vector<8x512xf32> to vector<8x128xf32>
      %108 = math.tanh %107 : vector<8x128xf32>
      %109 = vector.extract_strided_slice %94 {offsets = [0, 384], sizes = [8, 128], strides = [1, 1]} : vector<8x512xf32> to vector<8x128xf32>
      %110 = arith.negf %109 : vector<8x128xf32>
      %111 = math.exp %110 : vector<8x128xf32>
      %cst_101 = arith.constant 1.000000e+00 : f32
      %112 = vector.broadcast %cst_101 : f32 to vector<8x128xf32>
      %113 = arith.addf %112, %111 : vector<8x128xf32>
      %114 = arith.divf %112, %113 : vector<8x128xf32>
      %115 = arith.mulf %106, %89 : vector<8x128xf32>
      %116 = arith.mulf %100, %108 : vector<8x128xf32>
      %117 = arith.addf %115, %116 : vector<8x128xf32>
      %118 = math.tanh %117 : vector<8x128xf32>
      %119 = arith.mulf %114, %118 : vector<8x128xf32>
      %120 = arith.select %85, %119, %88 : vector<8x128xi1>, vector<8x128xf32>
      %121 = arith.select %85, %117, %89 : vector<8x128xi1>, vector<8x128xf32>
      %c0_102 = arith.constant 0 : index
      %c0_103 = arith.constant 0 : index
      %122 = vector.load %arg17[%c0_102, %c0_103] : memref<8x128xf32, #tpu.memory_space<vmem>>, vector<8x128xf32>
      tpu.vector_store %arg17[%c0_102, %c0_103], %120 {strides = array<i32>} : memref<8x128xf32, #tpu.memory_space<vmem>>, vector<8x128xf32>,
      %c0_104 = arith.constant 0 : index
      %c0_105 = arith.constant 0 : index
      %123 = vector.load %arg18[%c0_104, %c0_105] : memref<8x128xf32, #tpu.memory_space<vmem>>, vector<8x128xf32>
      tpu.vector_store %arg18[%c0_104, %c0_105], %121 {strides = array<i32>} : memref<8x128xf32, #tpu.memory_space<vmem>>, vector<8x128xf32>,
    }
    %c0_77 = arith.constant 0 : index
    %c0_78 = arith.constant 0 : index
    %60 = vector.load %arg17[%c0_77, %c0_78] : memref<8x128xf32, #tpu.memory_space<vmem>>, vector<8x128xf32>
    %c0_79 = arith.constant 0 : index
    %c0_80 = arith.constant 0 : index
    %61 = vector.load %arg12[%c0_79, %c0_80] : memref<128x32xf32, #tpu.memory_space<vmem>>, vector<128x32xf32>
    %cst_81 = arith.constant dense<0.000000e+00> : vector<8x32xf32>
    %62 = tpu.matmul %60, %61, %cst_81 {dimension_numbers = #tpu.dot_dimension_numbers<[1], [0], [0], [1], [0, 0, 1, 1], [], []>} : vector<8x128xf32>, vector<128x32xf32>, vector<8x32xf32> -> vector<8x32xf32>
    %c0_82 = arith.constant 0 : index
    %c0_83 = arith.constant 0 : index
    %63 = vector.load %arg13[%c0_82, %c0_83] : memref<1x32xf32, #tpu.memory_space<vmem>>, vector<1x32xf32>
    %64 = vector.broadcast %63 : vector<1x32xf32> to vector<8x32xf32>
    %65 = arith.addf %62, %64 : vector<8x32xf32>
    %c0_84 = arith.constant 0 : index
    %c0_85 = arith.constant 0 : index
    %66 = vector.load %arg14[%c0_84, %c0_85] : memref<32x16xf32, #tpu.memory_space<vmem>>, vector<32x16xf32>
    %cst_86 = arith.constant dense<0.000000e+00> : vector<8x16xf32>
    %67 = tpu.matmul %65, %66, %cst_86 {dimension_numbers = #tpu.dot_dimension_numbers<[1], [0], [0], [1], [0, 0, 1, 1], [], []>} : vector<8x32xf32>, vector<32x16xf32>, vector<8x16xf32> -> vector<8x16xf32>
    %cst_87 = arith.constant dense<0xFF800000> : vector<8xf32>
    %68 = vector.multi_reduction <maximumf>, %67, %cst_87 [1] : vector<8x16xf32> to vector<8xf32>
    %69 = vector.shape_cast %68 : vector<8xf32> to vector<8x1xf32>
    %70 = vector.broadcast %69 : vector<8x1xf32> to vector<8x16xf32>
    %71 = arith.subf %67, %70 : vector<8x16xf32>
    %72 = math.exp %71 : vector<8x16xf32>
    %cst_88 = arith.constant dense<0.000000e+00> : vector<8xf32>
    %73 = vector.multi_reduction <add>, %72, %cst_88 [1] : vector<8x16xf32> to vector<8xf32>
    %74 = vector.shape_cast %73 : vector<8xf32> to vector<8x1xf32>
    %75 = tpu.reciprocal %74 {approx = true} : vector<8x1xf32> -> vector<8x1xf32>
    %76 = vector.broadcast %75 : vector<8x1xf32> to vector<8x16xf32>
    %77 = arith.mulf %72, %76 : vector<8x16xf32>
    %c0_89 = arith.constant 0 : index
    %c0_90 = arith.constant 0 : index
    %78 = vector.load %arg15[%c0_89, %c0_90] : memref<8x32xf32, #tpu.memory_space<vmem>>, vector<8x32xf32>
    tpu.vector_store %arg15[%c0_89, %c0_90], %65 {strides = array<i32>} : memref<8x32xf32, #tpu.memory_space<vmem>>, vector<8x32xf32>,
    %c0_91 = arith.constant 0 : index
    %c0_92 = arith.constant 0 : index
    %79 = vector.load %arg16[%c0_91, %c0_92] : memref<8x16xf32, #tpu.memory_space<vmem>>, vector<8x16xf32>
    tpu.vector_store %arg16[%c0_91, %c0_92], %77 {strides = array<i32>} : memref<8x16xf32, #tpu.memory_space<vmem>>, vector<8x16xf32>,
    return
  }
}

</mosaic_0001>

<llo_original>
// kernel: tpu_custom_call.1
$region0: #{tpu_custom_call.1}
  #allocation0 [shape = 'u32[]', space=smem, size = 0x4, offset = 0x4, fixed_abs, tag = 'smem constant byte address 0x4 - core index']
  #allocation1 [shape = 'u32[144,128]{1,0:T(1,128)}', space=vmem, size = 0x12000, scoped, tag = 'internal scratch']
  #allocation2 [shape = 'f32[8,128]{1,0:T(8,128)}', space=vmem, size = 0x1000, scoped, tag = 'scratch operand']
  #allocation3 [shape = 'f32[8,128]{1,0:T(8,128)}', space=vmem, size = 0x1000, scoped, tag = 'scratch operand']
  #allocation4 [shape = 'f32[64,128]{1,0:T(8,128)}', space=vmem, size = 0x8000, scoped, tag = 'scratch operand']
  #allocation5 [shape = 'f32[64,512]{1,0:T(8,128)}', space=vmem, size = 0x20000, scoped, tag = 'scratch operand']
  #allocation6 [shape = 's32[1]{0:T(128)S(6)}', space=smem, size = 0x200, scoped, tag = 'scoped memory for tpu_custom_call.1']
  %s0 = inlined_call_operand.<no memory space> [shape: s32[1], index: 0, kind: input, shape index: {}]
  %s1 = inlined_call_operand.vmem [shape: s32[8,1], index: 1, kind: input, shape index: {}]
  %s2 = inlined_call_operand.vmem [shape: bf16[64,64], index: 2, kind: input, shape index: {}]
  %s3 = inlined_call_operand.vmem [shape: bf16[64,512], index: 3, kind: input, shape index: {}]
  %s4 = inlined_call_operand.hbm [shape: bf16[128,512], index: 4, kind: input, shape index: {}]
  %s5 = inlined_call_operand.vmem [shape: f32[1,512], index: 5, kind: input, shape index: {}]
  %s6 = inlined_call_operand.hbm [shape: bf16[128,512], index: 6, kind: input, shape index: {}]
  %s7 = inlined_call_operand.hbm [shape: bf16[128,512], index: 7, kind: input, shape index: {}]
  %s8 = inlined_call_operand.vmem [shape: f32[1,512], index: 8, kind: input, shape index: {}]
  %s9 = inlined_call_operand.hbm [shape: bf16[128,512], index: 9, kind: input, shape index: {}]
  %s10 = inlined_call_operand.hbm [shape: bf16[128,512], index: 10, kind: input, shape index: {}]
  %s11 = inlined_call_operand.vmem [shape: f32[1,512], index: 11, kind: input, shape index: {}]
  %s12 = inlined_call_operand.vmem [shape: f32[128,32], index: 12, kind: input, shape index: {}]
  %s13 = inlined_call_operand.vmem [shape: f32[1,32], index: 13, kind: input, shape index: {}]
  %s14 = inlined_call_operand.vmem [shape: f32[32,16], index: 14, kind: input, shape index: {}]
  %s15 = inlined_call_operand.hbm [shape: f32[8,32], index: 15, kind: output, shape index: {0}]
  %s16 = inlined_call_operand.hbm [shape: f32[8,16], index: 16, kind: output, shape index: {1}]
  %17 = xla_tuple %s15, %s16
  %s18 = sld [smem:[#allocation0]]
  $region119: #{tpu_custom_call.1} parent=0
    _
  %s20 = ssub.s32 1, %s18
  %s21 = scalar_select 0, %s20, %s18
  %22 = sst [smem:[#allocation6]] %s0
  $region1: #{tpu_custom_call.1} parent=0
    #allocation7 [shape = 'u8[131072]{0}', space=vmem, size = 0x20000, scoped, tag = 'input window, operand 4, single buffered']
    #allocation8 [shape = 's32[1]{0}', space=sflag, size = 0x4, scoped, tag = 'scoped memory for tpu_custom_call.1']
    #allocation9 [shape = 's32[1]{0}', space=sflag, size = 0x4, scoped, tag = 'scoped memory for tpu_custom_call.1']
    #allocation10 [shape = 'u8[131072]{0}', space=vmem, size = 0x20000, scoped, tag = 'input window, operand 6, single buffered']
    #allocation11 [shape = 's32[1]{0}', space=sflag, size = 0x4, scoped, tag = 'scoped memory for tpu_custom_call.1']
    #allocation12 [shape = 'u8[131072]{0}', space=vmem, size = 0x20000, scoped, tag = 'input window, operand 7, single buffered']
    #allocation13 [shape = 'u8[131072]{0}', space=vmem, size = 0x20000, scoped, tag = 'input window, operand 9, single buffered']
    #allocation14 [shape = 's32[1]{0}', space=sflag, size = 0x4, scoped, tag = 'scoped memory for tpu_custom_call.1']
    #allocation15 [shape = 'u8[131072]{0}', space=vmem, size = 0x20000, scoped, tag = 'input window, operand 10, single buffered']
    #allocation16 [shape = 'u8[4096]{0}', space=vmem, size = 0x1000, scoped, tag = 'output window, operand 0, single buffered']
    #allocation17 [shape = 'u8[4096]{0}', space=vmem, size = 0x1000, scoped, tag = 'output window, operand 1, single buffered']
    #allocation18 [shape = 's32[1]{0}', space=sflag, size = 0x4, scoped, tag = 'scoped memory for tpu_custom_call.1']
    %23 = vsyncpa [#allocation8], 0
    %24 = vsyncpa [#allocation11], 0
    %25 = vsyncpa [#allocation14], 0
    %26 = vsyncpa [#allocation9], 0
    %27 = vsyncpa [#allocation18], 0
    // Predicated region
    $region2: #{tpu_custom_call.1} parent=1 // pred_check
      _
    $region3: #{tpu_custom_call.1} parent=1 // pred_check_branch
      %29 = sbr.rel (0) target = $region5
    $region4: #{tpu_custom_call.1} parent=1 // pred_region
      _
    $region5: #{tpu_custom_call.1} parent=1 // pred_fallthru
      _
    // Predicated region
    $region6: #{tpu_custom_call.1} parent=1 // pred_check
      _
    $region7: #{tpu_custom_call.1} parent=1 // pred_check_branch
      %31 = sbr.rel (0) target = $region9
    $region8: #{tpu_custom_call.1} parent=1 // pred_region
      _
    $region9: #{tpu_custom_call.1} parent=1 // pred_fallthru
      _
    // Predicated region
    $region10: #{tpu_custom_call.1} parent=1 // pred_check
      _
    $region11: #{tpu_custom_call.1} parent=1 // pred_check_branch
      %33 = sbr.rel (0) target = $region13
    $region12: #{tpu_custom_call.1} parent=1 // pred_region
      _
    $region13: #{tpu_custom_call.1} parent=1 // pred_fallthru
      _
    // Predicated region
    $region14: #{tpu_custom_call.1} parent=1 // pred_check
      _
    $region15: #{tpu_custom_call.1} parent=1 // pred_check_branch
      %35 = sbr.rel (0) target = $region17
    $region16: #{tpu_custom_call.1} parent=1 // pred_region
      _
    $region17: #{tpu_custom_call.1} parent=1 // pred_fallthru
      _
    // Predicated region
    $region18: #{tpu_custom_call.1} parent=1 // pred_check
      _
    $region19: #{tpu_custom_call.1} parent=1 // pred_check_branch
      %37 = sbr.rel (0) target = $region21
    $region20: #{tpu_custom_call.1} parent=1 // pred_region
      %s39 = ssub.s32 4096, 4096
      %40 = vsyncadd [#allocation8], %s39
      %s41 = sshll.u32 [#allocation7], 4
      %s42 = int_to_ptr.vmem [resolvable:$true] %s41
      %47 = dma.hbm_to_vmem [thread:$0]  %s4, 4096, %s42, [#allocation8], 256, 256, 16
    $region21: #{tpu_custom_call.1} parent=1 // pred_fallthru
      _
    // Predicated region
    $region22: #{tpu_custom_call.1} parent=1 // pred_check
      _
    $region23: #{tpu_custom_call.1} parent=1 // pred_check_branch
      %49 = sbr.rel (0) target = $region25
    $region24: #{tpu_custom_call.1} parent=1 // pred_region
      _
    $region25: #{tpu_custom_call.1} parent=1 // pred_fallthru
      _
    // Predicated region
    $region26: #{tpu_custom_call.1} parent=1 // pred_check
      _
    $region27: #{tpu_custom_call.1} parent=1 // pred_check_branch
      %51 = sbr.rel (0) target = $region29
    $region28: #{tpu_custom_call.1} parent=1 // pred_region
      %s53 = ssub.s32 4096, 4096
      %54 = vsyncadd [#allocation11], %s53
      %s55 = sshll.u32 [#allocation10], 4
      %s56 = int_to_ptr.vmem [resolvable:$true] %s55
      %61 = dma.hbm_to_vmem [thread:$0]  %s6, 4096, %s56, [#allocation11], 256, 256, 16
    $region29: #{tpu_custom_call.1} parent=1 // pred_fallthru
      _
    // Predicated region
    $region30: #{tpu_custom_call.1} parent=1 // pred_check
      _
    $region31: #{tpu_custom_call.1} parent=1 // pred_check_branch
      %63 = sbr.rel (0) target = $region33
    $region32: #{tpu_custom_call.1} parent=1 // pred_region
      %s65 = ssub.s32 4096, 4096
      %66 = vsyncadd [#allocation11], %s65
      %s67 = sshll.u32 [#allocation12], 4
      %s68 = int_to_ptr.vmem [resolvable:$true] %s67
      %73 = dma.hbm_to_vmem [thread:$0]  %s7, 4096, %s68, [#allocation11], 256, 256, 16
    $region33: #{tpu_custom_call.1} parent=1 // pred_fallthru
      _
    // Predicated region
    $region34: #{tpu_custom_call.1} parent=1 // pred_check
      _
    $region35: #{tpu_custom_call.1} parent=1 // pred_check_branch
      %75 = sbr.rel (0) target = $region37
    $region36: #{tpu_custom_call.1} parent=1 // pred_region
      _
    $region37: #{tpu_custom_call.1} parent=1 // pred_fallthru
      _
    // Predicated region
    $region38: #{tpu_custom_call.1} parent=1 // pred_check
      _
    $region39: #{tpu_custom_call.1} parent=1 // pred_check_branch
      %77 = sbr.rel (0) target = $region41
    $region40: #{tpu_custom_call.1} parent=1 // pred_region
      %s79 = ssub.s32 4096, 4096
      %80 = vsyncadd [#allocation14], %s79
      %s81 = sshll.u32 [#allocation13], 4
      %s82 = int_to_ptr.vmem [resolvable:$true] %s81
      %87 = dma.hbm_to_vmem [thread:$0]  %s9, 4096, %s82, [#allocation14], 256, 256, 16
    $region41: #{tpu_custom_call.1} parent=1 // pred_fallthru
      _
    // Predicated region
    $region42: #{tpu_custom_call.1} parent=1 // pred_check
      _
    $region43: #{tpu_custom_call.1} parent=1 // pred_check_branch
      %89 = sbr.rel (0) target = $region45
    $region44: #{tpu_custom_call.1} parent=1 // pred_region
      %s91 = ssub.s32 4096, 4096
      %92 = vsyncadd [#allocation14], %s91
      %s93 = sshll.u32 [#allocation15], 4
      %s94 = int_to_ptr.vmem [resolvable:$true] %s93
      %99 = dma.hbm_to_vmem [thread:$0]  %s10, 4096, %s94, [#allocation14], 256, 256, 16
    $region45: #{tpu_custom_call.1} parent=1 // pred_fallthru
      _
    // Predicated region
    $region46: #{tpu_custom_call.1} parent=1 // pred_check
      _
    $region47: #{tpu_custom_call.1} parent=1 // pred_check_branch
      %101 = sbr.rel (0) target = $region49
    $region48: #{tpu_custom_call.1} parent=1 // pred_region
      _
    $region49: #{tpu_custom_call.1} parent=1 // pred_fallthru
      _
    // Predicated region
    $region50: #{tpu_custom_call.1} parent=1 // pred_check
      _
    $region51: #{tpu_custom_call.1} parent=1 // pred_check_branch
      %103 = sbr.rel (0) target = $region53
    $region52: #{tpu_custom_call.1} parent=1 // pred_region
      _
    $region53: #{tpu_custom_call.1} parent=1 // pred_fallthru
      _
    // Predicated region
    $region54: #{tpu_custom_call.1} parent=1 // pred_check
      _
    $region55: #{tpu_custom_call.1} parent=1 // pred_check_branch
      %105 = sbr.rel (0) target = $region57
    $region56: #{tpu_custom_call.1} parent=1 // pred_region
      _
    $region57: #{tpu_custom_call.1} parent=1 // pred_fallthru
      _
    // Predicated region
    $region58: #{tpu_custom_call.1} parent=1 // pred_check
      _
    $region59: #{tpu_custom_call.1} parent=1 // pred_check_branch
      %107 = sbr.rel (0) target = $region61
    $region60: #{tpu_custom_call.1} parent=1 // pred_region
      _
    $region61: #{tpu_custom_call.1} parent=1 // pred_fallthru
      _
    // Predicated region
    $region62: #{tpu_custom_call.1} parent=1 // pred_check
      _
    $region63: #{tpu_custom_call.1} parent=1 // pred_check_branch
      %109 = sbr.rel (0) target = $region65
    $region64: #{tpu_custom_call.1} parent=1 // pred_region
      %110 = dma.done [#allocation8], 4096
    $region65: #{tpu_custom_call.1} parent=1 // pred_fallthru
      _
    // Predicated region
    $region66: #{tpu_custom_call.1} parent=1 // pred_check
      _
    $region67: #{tpu_custom_call.1} parent=1 // pred_check_branch
      %112 = sbr.rel (0) target = $region69
    $region68: #{tpu_custom_call.1} parent=1 // pred_region
      %113 = dma.done [#allocation11], 4096
    $region69: #{tpu_custom_call.1} parent=1 // pred_fallthru
      _
    // Predicated region
    $region70: #{tpu_custom_call.1} parent=1 // pred_check
      _
    $region71: #{tpu_custom_call.1} parent=1 // pred_check_branch
      %115 = sbr.rel (0) target = $region73
    $region72: #{tpu_custom_call.1} parent=1 // pred_region
      %116 = dma.done [#allocation11], 4096
    $region73: #{tpu_custom_call.1} parent=1 // pred_fallthru
      _
    // Predicated region
    $region74: #{tpu_custom_call.1} parent=1 // pred_check
      _
    $region75: #{tpu_custom_call.1} parent=1 // pred_check_branch
      %118 = sbr.rel (0) target = $region77
    $region76: #{tpu_custom_call.1} parent=1 // pred_region
      %119 = dma.done [#allocation14], 4096
    $region77: #{tpu_custom_call.1} parent=1 // pred_fallthru
      _
    // Predicated region
    $region78: #{tpu_custom_call.1} parent=1 // pred_check
      _
    $region79: #{tpu_custom_call.1} parent=1 // pred_check_branch
      %121 = sbr.rel (0) target = $region81
    $region80: #{tpu_custom_call.1} parent=1 // pred_region
      %122 = dma.done [#allocation14], 4096
    $region81: #{tpu_custom_call.1} parent=1 // pred_fallthru
      _
    %s124 = sld [smem:[#allocation6]]
    %v125 = vld [vmem:[%s1] sm:$0xff]
    %126 = vst [vmem:[#allocation4] sm:$0xff] 0.0
    %127 = vst [vmem:[#allocation4 + $0x8] sm:$0xff] 0.0
    %128 = vst [vmem:[#allocation4 + $0x10] sm:$0xff] 0.0
    %129 = vst [vmem:[#allocation4 + $0x18] sm:$0xff] 0.0
    %130 = vst [vmem:[#allocation4 + $0x20] sm:$0xff] 0.0
    %131 = vst [vmem:[#allocation4 + $0x28] sm:$0xff] 0.0
    %132 = vst [vmem:[#allocation4 + $0x30] sm:$0xff] 0.0
    %133 = vst [vmem:[#allocation4 + $0x38] sm:$0xff] 0.0
    %v134 = vld [vmem:[%s2] sm:$0xf]
    %v135 = vld [vmem:[%s2 + $0x4] sm:$0xf]
    %v136 = vld [vmem:[%s2 + $0x8] sm:$0xf]
    %v137 = vld [vmem:[%s2 + $0xc] sm:$0xf]
    %v138 = vld [vmem:[%s2 + $0x10] sm:$0xf]
    %v139 = vld [vmem:[%s2 + $0x14] sm:$0xf]
    %v140 = vld [vmem:[%s2 + $0x18] sm:$0xf]
    %v141 = vld [vmem:[%s2 + $0x1c] sm:$0xf]
    %v142 = vld [vmem:[%s3] sm:$0xff]
    %v143 = vld [vmem:[%s3 + $0x8] sm:$0xff]
    %v144 = vld [vmem:[%s3 + $0x10] sm:$0xff]
    %v145 = vld [vmem:[%s3 + $0x18] sm:$0xff]
    %v146 = vld [vmem:[%s3 + $0x20] sm:$0xff]
    %v147 = vld [vmem:[%s3 + $0x28] sm:$0xff]
    %v148 = vld [vmem:[%s3 + $0x30] sm:$0xff]
    %v149 = vld [vmem:[%s3 + $0x38] sm:$0xff]
    %v150 = vld [vmem:[%s3 + $0x40] sm:$0xff]
    %v151 = vld [vmem:[%s3 + $0x48] sm:$0xff]
    %v152 = vld [vmem:[%s3 + $0x50] sm:$0xff]
    %v153 = vld [vmem:[%s3 + $0x58] sm:$0xff]
    %v154 = vld [vmem:[%s3 + $0x60] sm:$0xff]
    %v155 = vld [vmem:[%s3 + $0x68] sm:$0xff]
    %v156 = vld [vmem:[%s3 + $0x70] sm:$0xff]
    %v157 = vld [vmem:[%s3 + $0x78] sm:$0xff]
    %v158 = vld [vmem:[%s5] sm:$0xf]
    %v160 = vlaneseq
    %v161 = vshrl.u32 %v160, 7
    %v162 = vsub.s32 0, %v161
    %v163 = vrot.slane %v158, %v162
    %v164 = vlaneseq
    %v165 = vshrl.u32 %v164, 7
    %v166 = vsub.s32 1, %v165
    %v167 = vrot.slane %v158, %v166
    %v168 = vlaneseq
    %v169 = vshrl.u32 %v168, 7
    %v170 = vsub.s32 2, %v169
    %v171 = vrot.slane %v158, %v170
    %v172 = vlaneseq
    %v173 = vshrl.u32 %v172, 7
    %v174 = vsub.s32 3, %v173
    %v175 = vrot.slane %v158, %v174
    %v188 = vunpack.c.l.b16 %v134
    %v189 = vunpack.c.l.b16 %v135
    %v190 = vunpack.c.l.b16 %v136
    %v191 = vunpack.c.l.b16 %v137
    %v192 = vunpack.c.l.b16 %v138
    %v193 = vunpack.c.l.b16 %v139
    %v194 = vunpack.c.l.b16 %v140
    %v195 = vunpack.c.l.b16 %v141
    %v196 = vpack.c.b16 %v189, %v188
    %v197 = vpack.c.b16 %v191, %v190
    %v198 = vpack.c.b16 %v193, %v192
    %v199 = vpack.c.b16 %v195, %v194
    %v216 = vunpack.c.l.b16 %v142
    %v217 = vunpack.c.h.b16 %v142
    %v218 = vunpack.c.l.b16 %v143
    %v219 = vunpack.c.h.b16 %v143
    %v220 = vunpack.c.l.b16 %v144
    %v221 = vunpack.c.h.b16 %v144
    %v222 = vunpack.c.l.b16 %v145
    %v223 = vunpack.c.h.b16 %v145
    %v224 = vunpack.c.l.b16 %v146
    %v225 = vunpack.c.h.b16 %v146
    %v226 = vunpack.c.l.b16 %v147
    %v227 = vunpack.c.h.b16 %v147
    %v228 = vunpack.c.l.b16 %v148
    %v229 = vunpack.c.h.b16 %v148
    %v230 = vunpack.c.l.b16 %v149
    %v231 = vunpack.c.h.b16 %v149
    %v232 = vunpack.c.l.b16 %v150
    %v233 = vunpack.c.h.b16 %v150
    %v234 = vunpack.c.l.b16 %v151
    %v235 = vunpack.c.h.b16 %v151
    %v236 = vunpack.c.l.b16 %v152
    %v237 = vunpack.c.h.b16 %v152
    %v238 = vunpack.c.l.b16 %v153
    %v239 = vunpack.c.h.b16 %v153
    %v240 = vunpack.c.l.b16 %v154
    %v241 = vunpack.c.h.b16 %v154
    %v242 = vunpack.c.l.b16 %v155
    %v243 = vunpack.c.h.b16 %v155
    %v244 = vunpack.c.l.b16 %v156
    %v245 = vunpack.c.h.b16 %v156
    %v246 = vunpack.c.l.b16 %v157
    %v247 = vunpack.c.h.b16 %v157
    %v248 = vpack.c.b16 %v220, %v216
    %v249 = vpack.c.b16 %v221, %v217
    %v250 = vpack.c.b16 %v222, %v218
    %v251 = vpack.c.b16 %v223, %v219
    %v252 = vpack.c.b16 %v228, %v224
    %v253 = vpack.c.b16 %v229, %v225
    %v254 = vpack.c.b16 %v230, %v226
    %v255 = vpack.c.b16 %v231, %v227
    %v256 = vpack.c.b16 %v236, %v232
    %v257 = vpack.c.b16 %v237, %v233
    %v258 = vpack.c.b16 %v238, %v234
    %v259 = vpack.c.b16 %v239, %v235
    %v260 = vpack.c.b16 %v244, %v240
    %v261 = vpack.c.b16 %v245, %v241
    %v262 = vpack.c.b16 %v246, %v242
    %v263 = vpack.c.b16 %v247, %v243
    %vm280 = vcmask 523264
    %v282 = vsel %vm280, %v196, 0
    %v285 = vsel %vm280, %v197, 0
    %v288 = vsel %vm280, %v198, 0
    %v291 = vsel %vm280, %v199, 0
    %293 = vmatprep.subr.bf16.mxu0 %v249
    %294 = vmatpush1.bf16.msra.mxu0 %v248
    %295 = vmatprep.subr.bf16.mxu0 %v253
    %296 = vmatpush1.bf16.msra.mxu0 %v252
    %297 = vmatprep.subr.bf16.mxu0 %v257
    %298 = vmatpush1.bf16.msra.mxu0 %v256
    %299 = vmatprep.subr.bf16.mxu0 %v261
    %300 = vmatpush1.bf16.msra.mxu0 %v260
    %301 = vmatprep.subr.bf16.mxu0 0
    %302 = vmatpush1.bf16.msra.mxu0 0
    %303 = vmatprep.subr.bf16.mxu0 0
    %304 = vmatpush1.bf16.msra.mxu0 0
    %305 = vmatprep.subr.bf16.mxu0 0
    %306 = vmatpush1.bf16.msra.mxu0 0
    %307 = vmatprep.subr.bf16.mxu0 0
    %308 = vmatpush1.bf16.msra.mxu0 0
    %309 = vmatprep.subr.bf16.mxu0 0
    %310 = vmatpush1.bf16.msra.mxu0 0
    %311 = vmatprep.subr.bf16.mxu0 0
    %312 = vmatpush1.bf16.msra.mxu0 0
    %313 = vmatprep.subr.bf16.mxu0 0
    %314 = vmatpush1.bf16.msra.mxu0 0
    %315 = vmatprep.subr.bf16.mxu0 0
    %316 = vmatpush1.bf16.msra.mxu0 0
    %317 = vmatprep.subr.bf16.mxu0 0
    %318 = vmatpush1.bf16.msra.mxu0 0
    %319 = vmatprep.subr.bf16.mxu0 0
    %320 = vmatpush1.bf16.msra.mxu0 0
    %321 = vmatprep.subr.bf16.mxu0 0
    %322 = vmatpush1.bf16.msra.mxu0 0
    %323 = vmatprep.subr.bf16.mxu0 0
    %324 = vmatpush1.bf16.msra.mxu0 0
    %325 = vmatprep.mubr.bf16.mxu0 0
    %326 = vmatmul.mubr.bf16.gmra.mrb[0].mxu0 %v282
    %v327 = vpop.f32.mrb[0].mxu0
    %v328 = vadd.f32 %v163, %v327
    %v329 = vpop.f32.mrb[0].mxu0
    %v330 = vadd.f32 %v167, %v329
    %v331 = vpop.f32.mrb[0].mxu0
    %v332 = vadd.f32 %v163, %v331
    %v333 = vpop.f32.mrb[0].mxu0
    %v334 = vadd.f32 %v167, %v333
    %335 = vmatprep.mubr.bf16.mxu0 0
    %336 = vmatmul.mubr.bf16.gmra.mrb[0].mxu0 %v285
    %v337 = vpop.f32.mrb[0].mxu0
    %v338 = vadd.f32 %v163, %v337
    %v339 = vpop.f32.mrb[0].mxu0
    %v340 = vadd.f32 %v167, %v339
    %v341 = vpop.f32.mrb[0].mxu0
    %v342 = vadd.f32 %v163, %v341
    %v343 = vpop.f32.mrb[0].mxu0
    %v344 = vadd.f32 %v167, %v343
    %345 = vmatprep.mubr.bf16.mxu0 0
    %346 = vmatmul.mubr.bf16.gmra.mrb[0].mxu0 %v288
    %v347 = vpop.f32.mrb[0].mxu0
    %v348 = vadd.f32 %v163, %v347
    %v349 = vpop.f32.mrb[0].mxu0
    %v350 = vadd.f32 %v167, %v349
    %v351 = vpop.f32.mrb[0].mxu0
    %v352 = vadd.f32 %v163, %v351
    %v353 = vpop.f32.mrb[0].mxu0
    %v354 = vadd.f32 %v167, %v353
    %355 = vmatprep.mubr.bf16.mxu0 0
    %356 = vmatmul.mubr.bf16.gmra.mrb[0].mxu0 %v291
    %v357 = vpop.f32.mrb[0].mxu0
    %v358 = vadd.f32 %v163, %v357
    %v359 = vpop.f32.mrb[0].mxu0
    %v360 = vadd.f32 %v167, %v359
    %v361 = vpop.f32.mrb[0].mxu0
    %v362 = vadd.f32 %v163, %v361
    %v363 = vpop.f32.mrb[0].mxu0
    %v364 = vadd.f32 %v167, %v363
    %365 = vdwg.mxu0
    %366 = vmatprep.subr.bf16.mxu0 %v251
    %367 = vmatpush1.bf16.msra.mxu0 %v250
    %368 = vmatprep.subr.bf16.mxu0 %v255
    %369 = vmatpush1.bf16.msra.mxu0 %v254
    %370 = vmatprep.subr.bf16.mxu0 %v259
    %371 = vmatpush1.bf16.msra.mxu0 %v258
    %372 = vmatprep.subr.bf16.mxu0 %v263
    %373 = vmatpush1.bf16.msra.mxu0 %v262
    %374 = vmatprep.subr.bf16.mxu0 0
    %375 = vmatpush1.bf16.msra.mxu0 0
    %376 = vmatprep.subr.bf16.mxu0 0
    %377 = vmatpush1.bf16.msra.mxu0 0
    %378 = vmatprep.subr.bf16.mxu0 0
    %379 = vmatpush1.bf16.msra.mxu0 0
    %380 = vmatprep.subr.bf16.mxu0 0
    %381 = vmatpush1.bf16.msra.mxu0 0
    %382 = vmatprep.subr.bf16.mxu0 0
    %383 = vmatpush1.bf16.msra.mxu0 0
    %384 = vmatprep.subr.bf16.mxu0 0
    %385 = vmatpush1.bf16.msra.mxu0 0
    %386 = vmatprep.subr.bf16.mxu0 0
    %387 = vmatpush1.bf16.msra.mxu0 0
    %388 = vmatprep.subr.bf16.mxu0 0
    %389 = vmatpush1.bf16.msra.mxu0 0
    %390 = vmatprep.subr.bf16.mxu0 0
    %391 = vmatpush1.bf16.msra.mxu0 0
    %392 = vmatprep.subr.bf16.mxu0 0
    %393 = vmatpush1.bf16.msra.mxu0 0
    %394 = vmatprep.subr.bf16.mxu0 0
    %395 = vmatpush1.bf16.msra.mxu0 0
    %396 = vmatprep.subr.bf16.mxu0 0
    %397 = vmatpush1.bf16.msra.mxu0 0
    %398 = vmatprep.mubr.bf16.mxu0 0
    %399 = vmatmul.mubr.bf16.gmra.mrb[0].mxu0 %v282
    %v400 = vpop.f32.mrb[0].mxu0
    %v401 = vadd.f32 %v171, %v400
    %v402 = vpop.f32.mrb[0].mxu0
    %v403 = vadd.f32 %v175, %v402
    %v404 = vpop.f32.mrb[0].mxu0
    %v405 = vadd.f32 %v171, %v404
    %v406 = vpop.f32.mrb[0].mxu0
    %v407 = vadd.f32 %v175, %v406
    %408 = vmatprep.mubr.bf16.mxu0 0
    %409 = vmatmul.mubr.bf16.gmra.mrb[0].mxu0 %v285
    %v410 = vpop.f32.mrb[0].mxu0
    %v411 = vadd.f32 %v171, %v410
    %v412 = vpop.f32.mrb[0].mxu0
    %v413 = vadd.f32 %v175, %v412
    %v414 = vpop.f32.mrb[0].mxu0
    %v415 = vadd.f32 %v171, %v414
    %v416 = vpop.f32.mrb[0].mxu0
    %v417 = vadd.f32 %v175, %v416
    %418 = vmatprep.mubr.bf16.mxu0 0
    %419 = vmatmul.mubr.bf16.gmra.mrb[0].mxu0 %v288
    %v420 = vpop.f32.mrb[0].mxu0
    %v421 = vadd.f32 %v171, %v420
    %v422 = vpop.f32.mrb[0].mxu0
    %v423 = vadd.f32 %v175, %v422
    %v424 = vpop.f32.mrb[0].mxu0
    %v425 = vadd.f32 %v171, %v424
    %v426 = vpop.f32.mrb[0].mxu0
    %v427 = vadd.f32 %v175, %v426
    %428 = vmatprep.mubr.bf16.mxu0 0
    %429 = vmatmul.mubr.bf16.gmra.mrb[0].mxu0 %v291
    %v430 = vpop.f32.mrb[0].mxu0
    %v431 = vadd.f32 %v171, %v430
    %v432 = vpop.f32.mrb[0].mxu0
    %v433 = vadd.f32 %v175, %v432
    %v434 = vpop.f32.mrb[0].mxu0
    %v435 = vadd.f32 %v171, %v434
    %v436 = vpop.f32.mrb[0].mxu0
    %v437 = vadd.f32 %v175, %v436
    %438 = vdwg.mxu0
    %439 = vst [vmem:[#allocation5] sm:$0xff] %v328
    %440 = vst [vmem:[#allocation5 + $0x8] sm:$0xff] %v330
    %441 = vst [vmem:[#allocation5 + $0x10] sm:$0xff] %v401
    %442 = vst [vmem:[#allocation5 + $0x18] sm:$0xff] %v403
    %443 = vst [vmem:[#allocation5 + $0x20] sm:$0xff] %v332
    %444 = vst [vmem:[#allocation5 + $0x28] sm:$0xff] %v334
    %445 = vst [vmem:[#allocation5 + $0x30] sm:$0xff] %v405
    %446 = vst [vmem:[#allocation5 + $0x38] sm:$0xff] %v407
    %447 = vst [vmem:[#allocation5 + $0x40] sm:$0xff] %v338
    %448 = vst [vmem:[#allocation5 + $0x48] sm:$0xff] %v340
    %449 = vst [vmem:[#allocation5 + $0x50] sm:$0xff] %v411
    %450 = vst [vmem:[#allocation5 + $0x58] sm:$0xff] %v413
    %451 = vst [vmem:[#allocation5 + $0x60] sm:$0xff] %v342
    %452 = vst [vmem:[#allocation5 + $0x68] sm:$0xff] %v344
    %453 = vst [vmem:[#allocation5 + $0x70] sm:$0xff] %v415
    %454 = vst [vmem:[#allocation5 + $0x78] sm:$0xff] %v417
    %455 = vst [vmem:[#allocation5 + $0x80] sm:$0xff] %v348
    %456 = vst [vmem:[#allocation5 + $0x88] sm:$0xff] %v350
    %457 = vst [vmem:[#allocation5 + $0x90] sm:$0xff] %v421
    %458 = vst [vmem:[#allocation5 + $0x98] sm:$0xff] %v423
    %459 = vst [vmem:[#allocation5 + $0xa0] sm:$0xff] %v352
    %460 = vst [vmem:[#allocation5 + $0xa8] sm:$0xff] %v354
    %461 = vst [vmem:[#allocation5 + $0xb0] sm:$0xff] %v425
    %462 = vst [vmem:[#allocation5 + $0xb8] sm:$0xff] %v427
    %463 = vst [vmem:[#allocation5 + $0xc0] sm:$0xff] %v358
    %464 = vst [vmem:[#allocation5 + $0xc8] sm:$0xff] %v360
    %465 = vst [vmem:[#allocation5 + $0xd0] sm:$0xff] %v431
    %466 = vst [vmem:[#allocation5 + $0xd8] sm:$0xff] %v433
    %467 = vst [vmem:[#allocation5 + $0xe0] sm:$0xff] %v362
    %468 = vst [vmem:[#allocation5 + $0xe8] sm:$0xff] %v364
    %469 = vst [vmem:[#allocation5 + $0xf0] sm:$0xff] %v435
    %470 = vst [vmem:[#allocation5 + $0xf8] sm:$0xff] %v437
    %471 = vst [vmem:[#allocation2] sm:$0xff] 0.0
    %472 = vst [vmem:[#allocation3] sm:$0xff] 0.0
    %v473 = vld [vmem:[#allocation7] sm:$0xff]
    %v474 = vld [vmem:[#allocation7 + $0x8] sm:$0xff]
    %v475 = vld [vmem:[#allocation7 + $0x10] sm:$0xff]
    %v476 = vld [vmem:[#allocation7 + $0x18] sm:$0xff]
    %v477 = vld [vmem:[#allocation7 + $0x20] sm:$0xff]
    %v478 = vld [vmem:[#allocation7 + $0x28] sm:$0xff]
    %v479 = vld [vmem:[#allocation7 + $0x30] sm:$0xff]
    %v480 = vld [vmem:[#allocation7 + $0x38] sm:$0xff]
    %v481 = vld [vmem:[#allocation7 + $0x40] sm:$0xff]
    %v482 = vld [vmem:[#allocation7 + $0x48] sm:$0xff]
    %v483 = vld [vmem:[#allocation7 + $0x50] sm:$0xff]
    %v484 = vld [vmem:[#allocation7 + $0x58] sm:$0xff]
    %v485 = vld [vmem:[#allocation7 + $0x60] sm:$0xff]
    %v486 = vld [vmem:[#allocation7 + $0x68] sm:$0xff]
    %v487 = vld [vmem:[#allocation7 + $0x70] sm:$0xff]
    %v488 = vld [vmem:[#allocation7 + $0x78] sm:$0xff]
    %v489 = vld [vmem:[#allocation7 + $0x80] sm:$0xff]
    %v490 = vld [vmem:[#allocation7 + $0x88] sm:$0xff]
    %v491 = vld [vmem:[#allocation7 + $0x90] sm:$0xff]
    %v492 = vld [vmem:[#allocation7 + $0x98] sm:$0xff]
    %v493 = vld [vmem:[#allocation7 + $0xa0] sm:$0xff]
    %v494 = vld [vmem:[#allocation7 + $0xa8] sm:$0xff]
    %v495 = vld [vmem:[#allocation7 + $0xb0] sm:$0xff]
    %v496 = vld [vmem:[#allocation7 + $0xb8] sm:$0xff]
    %v497 = vld [vmem:[#allocation7 + $0xc0] sm:$0xff]
    %v498 = vld [vmem:[#allocation7 + $0xc8] sm:$0xff]
    %v499 = vld [vmem:[#allocation7 + $0xd0] sm:$0xff]
    %v500 = vld [vmem:[#allocation7 + $0xd8] sm:$0xff]
    %v501 = vld [vmem:[#allocation7 + $0xe0] sm:$0xff]
    %v502 = vld [vmem:[#allocation7 + $0xe8] sm:$0xff]
    %v503 = vld [vmem:[#allocation7 + $0xf0] sm:$0xff]
    %v504 = vld [vmem:[#allocation7 + $0xf8] sm:$0xff]
    // While loop
    $region82: #{tpu_custom_call.1} parent=1 // loop_pre_header
      _
    $region83: #{tpu_custom_call.1} parent=1 // loop_header
      %s506 = sphi 0, %s508
      %p507 = scmp.ge.s32.totalorder %s506, %s124
    $region84: #{tpu_custom_call.1} parent=1 // loop_header_branch
      %510 = sbr.rel (%p507) target = $region88
    $region85: #{tpu_custom_call.1} parent=1 // loop_body
      %v511 = vstv %s506
      %vm512 = vcmp.lt.s32.totalorder %v511, %v125
      %v513 = vsel %vm512, 1, 0
      %514 = vset.pattern.permute.xlu0 0
      %515 = vperm.xlu0 %514, %v513
      %v516 = vpop.permute.xlu0 %515
      %vm517 = vcmp.eq.s32.totalorder %v516, 1
      %s518 = smul.u32 %s506, 8
      %v519 = vld [vmem:[#allocation2] sm:$0xff]
      %v520 = vld [vmem:[#allocation3] sm:$0xff]
      %s521 = sshra.s32 %s518, 3
      %s522 = sand.u32 %s518, 7
      %s523 = smul.u32 %s521, 4
      %s524 = smul.addr %s523, 8
      %s525 = scalar_lea.vmem [#allocation5], %s524
      %v526 = vld [vmem:[%s525] sm:$0xff]
      %v527 = vld [vmem:[%s525 + $0x8] sm:$0xff]
      %v528 = vld [vmem:[%s525 + $0x10] sm:$0xff]
      %v529 = vld [vmem:[%s525 + $0x18] sm:$0xff]
      %v530 = vpack.c.bf16 %v519, %v519
      %v563 = vunpack.c.l.b16 %v473
      %v564 = vunpack.c.h.b16 %v473
      %v565 = vunpack.c.l.b16 %v474
      %v566 = vunpack.c.h.b16 %v474
      %v567 = vunpack.c.l.b16 %v475
      %v568 = vunpack.c.h.b16 %v475
      %v569 = vunpack.c.l.b16 %v476
      %v570 = vunpack.c.h.b16 %v476
      %v571 = vunpack.c.l.b16 %v477
      %v572 = vunpack.c.h.b16 %v477
      %v573 = vunpack.c.l.b16 %v478
      %v574 = vunpack.c.h.b16 %v478
      %v575 = vunpack.c.l.b16 %v479
      %v576 = vunpack.c.h.b16 %v479
      %v577 = vunpack.c.l.b16 %v480
      %v578 = vunpack.c.h.b16 %v480
      %v579 = vunpack.c.l.b16 %v481
      %v580 = vunpack.c.h.b16 %v481
      %v581 = vunpack.c.l.b16 %v482
      %v582 = vunpack.c.h.b16 %v482
      %v583 = vunpack.c.l.b16 %v483
      %v584 = vunpack.c.h.b16 %v483
      %v585 = vunpack.c.l.b16 %v484
      %v586 = vunpack.c.h.b16 %v484
      %v587 = vunpack.c.l.b16 %v485
      %v588 = vunpack.c.h.b16 %v485
      %v589 = vunpack.c.l.b16 %v486
      %v590 = vunpack.c.h.b16 %v486
      %v591 = vunpack.c.l.b16 %v487
      %v592 = vunpack.c.h.b16 %v487
      %v593 = vunpack.c.l.b16 %v488
      %v594 = vunpack.c.h.b16 %v488
      %v595 = vunpack.c.l.b16 %v489
      %v596 = vunpack.c.h.b16 %v489
      %v597 = vunpack.c.l.b16 %v490
      %v598 = vunpack.c.h.b16 %v490
      %v599 = vunpack.c.l.b16 %v491
      %v600 = vunpack.c.h.b16 %v491
      %v601 = vunpack.c.l.b16 %v492
      %v602 = vunpack.c.h.b16 %v492
      %v603 = vunpack.c.l.b16 %v493
      %v604 = vunpack.c.h.b16 %v493
      %v605 = vunpack.c.l.b16 %v494
      %v606 = vunpack.c.h.b16 %v494
      %v607 = vunpack.c.l.b16 %v495
      %v608 = vunpack.c.h.b16 %v495
      %v609 = vunpack.c.l.b16 %v496
      %v610 = vunpack.c.h.b16 %v496
      %v611 = vunpack.c.l.b16 %v497
      %v612 = vunpack.c.h.b16 %v497
      %v613 = vunpack.c.l.b16 %v498
      %v614 = vunpack.c.h.b16 %v498
      %v615 = vunpack.c.l.b16 %v499
      %v616 = vunpack.c.h.b16 %v499
      %v617 = vunpack.c.l.b16 %v500
      %v618 = vunpack.c.h.b16 %v500
      %v619 = vunpack.c.l.b16 %v501
      %v620 = vunpack.c.h.b16 %v501
      %v621 = vunpack.c.l.b16 %v502
      %v622 = vunpack.c.h.b16 %v502
      %v623 = vunpack.c.l.b16 %v503
      %v624 = vunpack.c.h.b16 %v503
      %v625 = vunpack.c.l.b16 %v504
      %v626 = vunpack.c.h.b16 %v504
      %v627 = vpack.c.b16 %v567, %v563
      %v628 = vpack.c.b16 %v568, %v564
      %v629 = vpack.c.b16 %v569, %v565
      %v630 = vpack.c.b16 %v570, %v566
      %v631 = vpack.c.b16 %v575, %v571
      %v632 = vpack.c.b16 %v576, %v572
      %v633 = vpack.c.b16 %v577, %v573
      %v634 = vpack.c.b16 %v578, %v574
      %v635 = vpack.c.b16 %v583, %v579
      %v636 = vpack.c.b16 %v584, %v580
      %v637 = vpack.c.b16 %v585, %v581
      %v638 = vpack.c.b16 %v586, %v582
      %v639 = vpack.c.b16 %v591, %v587
      %v640 = vpack.c.b16 %v592, %v588
      %v641 = vpack.c.b16 %v593, %v589
      %v642 = vpack.c.b16 %v594, %v590
      %v643 = vpack.c.b16 %v599, %v595
      %v644 = vpack.c.b16 %v600, %v596
      %v645 = vpack.c.b16 %v601, %v597
      %v646 = vpack.c.b16 %v602, %v598
      %v647 = vpack.c.b16 %v607, %v603
      %v648 = vpack.c.b16 %v608, %v604
      %v649 = vpack.c.b16 %v609, %v605
      %v650 = vpack.c.b16 %v610, %v606
      %v651 = vpack.c.b16 %v615, %v611
      %v652 = vpack.c.b16 %v616, %v612
      %v653 = vpack.c.b16 %v617, %v613
      %v654 = vpack.c.b16 %v618, %v614
      %v655 = vpack.c.b16 %v623, %v619
      %v656 = vpack.c.b16 %v624, %v620
      %v657 = vpack.c.b16 %v625, %v621
      %v658 = vpack.c.b16 %v626, %v622
      %691 = vmatprep.subr.bf16.mxu0 %v628
      %692 = vmatpush1.bf16.msra.mxu0 %v627
      %693 = vmatprep.subr.bf16.mxu0 %v632
      %694 = vmatpush1.bf16.msra.mxu0 %v631
      %695 = vmatprep.subr.bf16.mxu0 %v636
      %696 = vmatpush1.bf16.msra.mxu0 %v635
      %697 = vmatprep.subr.bf16.mxu0 %v640
      %698 = vmatpush1.bf16.msra.mxu0 %v639
      %699 = vmatprep.subr.bf16.mxu0 %v644
      %700 = vmatpush1.bf16.msra.mxu0 %v643
      %701 = vmatprep.subr.bf16.mxu0 %v648
      %702 = vmatpush1.bf16.msra.mxu0 %v647
      %703 = vmatprep.subr.bf16.mxu0 %v652
      %704 = vmatpush1.bf16.msra.mxu0 %v651
      %705 = vmatprep.subr.bf16.mxu0 %v656
      %706 = vmatpush1.bf16.msra.mxu0 %v655
      %707 = vmatprep.subr.bf16.mxu0 0
      %708 = vmatpush1.bf16.msra.mxu0 0
      %709 = vmatprep.subr.bf16.mxu0 0
      %710 = vmatpush1.bf16.msra.mxu0 0
      %711 = vmatprep.subr.bf16.mxu0 0
      %712 = vmatpush1.bf16.msra.mxu0 0
      %713 = vmatprep.subr.bf16.mxu0 0
      %714 = vmatpush1.bf16.msra.mxu0 0
      %715 = vmatprep.subr.bf16.mxu0 0
      %716 = vmatpush1.bf16.msra.mxu0 0
      %717 = vmatprep.subr.bf16.mxu0 0
      %718 = vmatpush1.bf16.msra.mxu0 0
      %719 = vmatprep.subr.bf16.mxu0 0
      %720 = vmatpush1.bf16.msra.mxu0 0
      %721 = vmatprep.subr.bf16.mxu0 0
      %722 = vmatpush1.bf16.msra.mxu0 0
      %723 = vmatprep.mubr.bf16.mxu0 0
      %724 = vmatmul.mubr.bf16.gmra.mrb[0].mxu0 %v530
      %v725 = vpop.f32.mrb[0].mxu0
      %v726 = vadd.f32 0.0, %v725
      %v727 = vpop.f32.mrb[0].mxu0
      %v728 = vadd.f32 0.0, %v727
      %v729 = vpop.f32.mrb[0].mxu0
      %v730 = vpop.f32.mrb[0].mxu0
      %731 = vdwg.mxu0
      %732 = vmatprep.subr.bf16.mxu0 %v630
      %733 = vmatpush1.bf16.msra.mxu0 %v629
      %734 = vmatprep.subr.bf16.mxu0 %v634
      %735 = vmatpush1.bf16.msra.mxu0 %v633
      %736 = vmatprep.subr.bf16.mxu0 %v638
      %737 = vmatpush1.bf16.msra.mxu0 %v637
      %738 = vmatprep.subr.bf16.mxu0 %v642
      %739 = vmatpush1.bf16.msra.mxu0 %v641
      %740 = vmatprep.subr.bf16.mxu0 %v646
      %741 = vmatpush1.bf16.msra.mxu0 %v645
      %742 = vmatprep.subr.bf16.mxu0 %v650
      %743 = vmatpush1.bf16.msra.mxu0 %v649
      %744 = vmatprep.subr.bf16.mxu0 %v654
      %745 = vmatpush1.bf16.msra.mxu0 %v653
      %746 = vmatprep.subr.bf16.mxu0 %v658
      %747 = vmatpush1.bf16.msra.mxu0 %v657
      %748 = vmatprep.subr.bf16.mxu0 0
      %749 = vmatpush1.bf16.msra.mxu0 0
      %750 = vmatprep.subr.bf16.mxu0 0
      %751 = vmatpush1.bf16.msra.mxu0 0
      %752 = vmatprep.subr.bf16.mxu0 0
      %753 = vmatpush1.bf16.msra.mxu0 0
      %754 = vmatprep.subr.bf16.mxu0 0
      %755 = vmatpush1.bf16.msra.mxu0 0
      %756 = vmatprep.subr.bf16.mxu0 0
      %757 = vmatpush1.bf16.msra.mxu0 0
      %758 = vmatprep.subr.bf16.mxu0 0
      %759 = vmatpush1.bf16.msra.mxu0 0
      %760 = vmatprep.subr.bf16.mxu0 0
      %761 = vmatpush1.bf16.msra.mxu0 0
      %762 = vmatprep.subr.bf16.mxu0 0
      %763 = vmatpush1.bf16.msra.mxu0 0
      %764 = vmatprep.mubr.bf16.mxu0 0
      %765 = vmatmul.mubr.bf16.gmra.mrb[0].mxu0 %v530
      %v766 = vpop.f32.mrb[0].mxu0
      %v767 = vadd.f32 0.0, %v766
      %v768 = vpop.f32.mrb[0].mxu0
      %v769 = vadd.f32 0.0, %v768
      %v770 = vpop.f32.mrb[0].mxu0
      %v771 = vpop.f32.mrb[0].mxu0
      %772 = vdwg.mxu0
      %v773 = vadd.f32 %v526, %v726
      %v774 = vadd.f32 %v527, %v728
      %v775 = vadd.f32 %v528, %v767
      %v776 = vadd.f32 %v529, %v769
      %v777 = vxor.u32 %v773, 2147483648
      %v778 = vmul.f32 %v777, 1.442695
      %v779 = vpow.pop %v778
      %v780 = vadd.f32 %v779, 1.0
      %v781 = vrcp.pop %v780
      %v782 = vmul.f32 1.0, %v781
      %v783 = vxor.u32 %v774, 2147483648
      %v784 = vmul.f32 %v783, 1.442695
      %v785 = vpow.pop %v784
      %v786 = vadd.f32 %v785, 1.0
      %v787 = vrcp.pop %v786
      %v788 = vmul.f32 1.0, %v787
      %v789 = vtanh.pop %v775
      %v790 = vxor.u32 %v776, 2147483648
      %v791 = vmul.f32 %v790, 1.442695
      %v792 = vpow.pop %v791
      %v793 = vadd.f32 %v792, 1.0
      %v794 = vrcp.pop %v793
      %v795 = vmul.f32 1.0, %v794
      %v796 = vmul.f32 %v788, %v520
      %v797 = vmul.f32 %v782, %v789
      %v798 = vadd.f32 %v796, %v797
      %v799 = vtanh.pop %v798
      %v800 = vmul.f32 %v795, %v799
      %v801 = vsel %vm517, %v800, %v519
      %v802 = vsel %vm517, %v798, %v520
      %803 = vst [vmem:[#allocation2] sm:$0xff] %v801
      %804 = vst [vmem:[#allocation3] sm:$0xff] %v802
      %s805 = scalar_lea.vmem [#allocation4], %s518
      %806 = vst [vmem:[%s805] sm:$0xff] %v801
    $region86: #{tpu_custom_call.1} parent=1 // loop_footer
      %s508 = sadd.s32 %s506, 1
    $region87: #{tpu_custom_call.1} parent=1 // loop_footer_branch
      %505 = sbr.rel target = $region83
    $region88: #{tpu_custom_call.1} parent=1 // loop_exit
      _
    %v807 = vld [vmem:[#allocation4] sm:$0xff]
    %v808 = vld [vmem:[#allocation4 + $0x8] sm:$0xff]
    %v809 = vld [vmem:[#allocation4 + $0x10] sm:$0xff]
    %v810 = vld [vmem:[#allocation4 + $0x18] sm:$0xff]
    %v811 = vld [vmem:[#allocation4 + $0x20] sm:$0xff]
    %v812 = vld [vmem:[#allocation4 + $0x28] sm:$0xff]
    %v813 = vld [vmem:[#allocation4 + $0x30] sm:$0xff]
    %v814 = vld [vmem:[#allocation4 + $0x38] sm:$0xff]
    %v815 = vpack.c.bf16 %v808, %v807
    %v816 = vpack.c.bf16 %v810, %v809
    %v817 = vpack.c.bf16 %v812, %v811
    %v818 = vpack.c.bf16 %v814, %v813
    %v819 = vld [vmem:[#allocation10] sm:$0xff]
    %v820 = vld [vmem:[#allocation10 + $0x8] sm:$0xff]
    %v821 = vld [vmem:[#allocation10 + $0x10] sm:$0xff]
    %v822 = vld [vmem:[#allocation10 + $0x18] sm:$0xff]
    %v823 = vld [vmem:[#allocation10 + $0x20] sm:$0xff]
    %v824 = vld [vmem:[#allocation10 + $0x28] sm:$0xff]
    %v825 = vld [vmem:[#allocation10 + $0x30] sm:$0xff]
    %v826 = vld [vmem:[#allocation10 + $0x38] sm:$0xff]
    %v827 = vld [vmem:[#allocation10 + $0x40] sm:$0xff]
    %v828 = vld [vmem:[#allocation10 + $0x48] sm:$0xff]
    %v829 = vld [vmem:[#allocation10 + $0x50] sm:$0xff]
    %v830 = vld [vmem:[#allocation10 + $0x58] sm:$0xff]
    %v831 = vld [vmem:[#allocation10 + $0x60] sm:$0xff]
    %v832 = vld [vmem:[#allocation10 + $0x68] sm:$0xff]
    %v833 = vld [vmem:[#allocation10 + $0x70] sm:$0xff]
    %v834 = vld [vmem:[#allocation10 + $0x78] sm:$0xff]
    %v835 = vld [vmem:[#allocation10 + $0x80] sm:$0xff]
    %v836 = vld [vmem:[#allocation10 + $0x88] sm:$0xff]
    %v837 = vld [vmem:[#allocation10 + $0x90] sm:$0xff]
    %v838 = vld [vmem:[#allocation10 + $0x98] sm:$0xff]
    %v839 = vld [vmem:[#allocation10 + $0xa0] sm:$0xff]
    %v840 = vld [vmem:[#allocation10 + $0xa8] sm:$0xff]
    %v841 = vld [vmem:[#allocation10 + $0xb0] sm:$0xff]
    %v842 = vld [vmem:[#allocation10 + $0xb8] sm:$0xff]
    %v843 = vld [vmem:[#allocation10 + $0xc0] sm:$0xff]
    %v844 = vld [vmem:[#allocation10 + $0xc8] sm:$0xff]
    %v845 = vld [vmem:[#allocation10 + $0xd0] sm:$0xff]
    %v846 = vld [vmem:[#allocation10 + $0xd8] sm:$0xff]
    %v847 = vld [vmem:[#allocation10 + $0xe0] sm:$0xff]
    %v848 = vld [vmem:[#allocation10 + $0xe8] sm:$0xff]
    %v849 = vld [vmem:[#allocation10 + $0xf0] sm:$0xff]
    %v850 = vld [vmem:[#allocation10 + $0xf8] sm:$0xff]
    %v851 = vld [vmem:[%s8] sm:$0xf]
    %v853 = vlaneseq
    %v854 = vshrl.u32 %v853, 7
    %v855 = vsub.s32 0, %v854
    %v856 = vrot.slane %v851, %v855
    %v857 = vlaneseq
    %v858 = vshrl.u32 %v857, 7
    %v859 = vsub.s32 1, %v858
    %v860 = vrot.slane %v851, %v859
    %v861 = vlaneseq
    %v862 = vshrl.u32 %v861, 7
    %v863 = vsub.s32 2, %v862
    %v864 = vrot.slane %v851, %v863
    %v865 = vlaneseq
    %v866 = vshrl.u32 %v865, 7
    %v867 = vsub.s32 3, %v866
    %v868 = vrot.slane %v851, %v867
    %v905 = vunpack.c.l.b16 %v819
    %v906 = vunpack.c.h.b16 %v819
    %v907 = vunpack.c.l.b16 %v820
    %v908 = vunpack.c.h.b16 %v820
    %v909 = vunpack.c.l.b16 %v821
    %v910 = vunpack.c.h.b16 %v821
    %v911 = vunpack.c.l.b16 %v822
    %v912 = vunpack.c.h.b16 %v822
    %v913 = vunpack.c.l.b16 %v823
    %v914 = vunpack.c.h.b16 %v823
    %v915 = vunpack.c.l.b16 %v824
    %v916 = vunpack.c.h.b16 %v824
    %v917 = vunpack.c.l.b16 %v825
    %v918 = vunpack.c.h.b16 %v825
    %v919 = vunpack.c.l.b16 %v826
    %v920 = vunpack.c.h.b16 %v826
    %v921 = vunpack.c.l.b16 %v827
    %v922 = vunpack.c.h.b16 %v827
    %v923 = vunpack.c.l.b16 %v828
    %v924 = vunpack.c.h.b16 %v828
    %v925 = vunpack.c.l.b16 %v829
    %v926 = vunpack.c.h.b16 %v829
    %v927 = vunpack.c.l.b16 %v830
    %v928 = vunpack.c.h.b16 %v830
    %v929 = vunpack.c.l.b16 %v831
    %v930 = vunpack.c.h.b16 %v831
    %v931 = vunpack.c.l.b16 %v832
    %v932 = vunpack.c.h.b16 %v832
    %v933 = vunpack.c.l.b16 %v833
    %v934 = vunpack.c.h.b16 %v833
    %v935 = vunpack.c.l.b16 %v834
    %v936 = vunpack.c.h.b16 %v834
    %v937 = vunpack.c.l.b16 %v835
    %v938 = vunpack.c.h.b16 %v835
    %v939 = vunpack.c.l.b16 %v836
    %v940 = vunpack.c.h.b16 %v836
    %v941 = vunpack.c.l.b16 %v837
    %v942 = vunpack.c.h.b16 %v837
    %v943 = vunpack.c.l.b16 %v838
    %v944 = vunpack.c.h.b16 %v838
    %v945 = vunpack.c.l.b16 %v839
    %v946 = vunpack.c.h.b16 %v839
    %v947 = vunpack.c.l.b16 %v840
    %v948 = vunpack.c.h.b16 %v840
    %v949 = vunpack.c.l.b16 %v841
    %v950 = vunpack.c.h.b16 %v841
    %v951 = vunpack.c.l.b16 %v842
    %v952 = vunpack.c.h.b16 %v842
    %v953 = vunpack.c.l.b16 %v843
    %v954 = vunpack.c.h.b16 %v843
    %v955 = vunpack.c.l.b16 %v844
    %v956 = vunpack.c.h.b16 %v844
    %v957 = vunpack.c.l.b16 %v845
    %v958 = vunpack.c.h.b16 %v845
    %v959 = vunpack.c.l.b16 %v846
    %v960 = vunpack.c.h.b16 %v846
    %v961 = vunpack.c.l.b16 %v847
    %v962 = vunpack.c.h.b16 %v847
    %v963 = vunpack.c.l.b16 %v848
    %v964 = vunpack.c.h.b16 %v848
    %v965 = vunpack.c.l.b16 %v849
    %v966 = vunpack.c.h.b16 %v849
    %v967 = vunpack.c.l.b16 %v850
    %v968 = vunpack.c.h.b16 %v850
    %v969 = vpack.c.b16 %v909, %v905
    %v970 = vpack.c.b16 %v910, %v906
    %v971 = vpack.c.b16 %v911, %v907
    %v972 = vpack.c.b16 %v912, %v908
    %v973 = vpack.c.b16 %v917, %v913
    %v974 = vpack.c.b16 %v918, %v914
    %v975 = vpack.c.b16 %v919, %v915
    %v976 = vpack.c.b16 %v920, %v916
    %v977 = vpack.c.b16 %v925, %v921
    %v978 = vpack.c.b16 %v926, %v922
    %v979 = vpack.c.b16 %v927, %v923
    %v980 = vpack.c.b16 %v928, %v924
    %v981 = vpack.c.b16 %v933, %v929
    %v982 = vpack.c.b16 %v934, %v930
    %v983 = vpack.c.b16 %v935, %v931
    %v984 = vpack.c.b16 %v936, %v932
    %v985 = vpack.c.b16 %v941, %v937
    %v986 = vpack.c.b16 %v942, %v938
    %v987 = vpack.c.b16 %v943, %v939
    %v988 = vpack.c.b16 %v944, %v940
    %v989 = vpack.c.b16 %v949, %v945
    %v990 = vpack.c.b16 %v950, %v946
    %v991 = vpack.c.b16 %v951, %v947
    %v992 = vpack.c.b16 %v952, %v948
    %v993 = vpack.c.b16 %v957, %v953
    %v994 = vpack.c.b16 %v958, %v954
    %v995 = vpack.c.b16 %v959, %v955
    %v996 = vpack.c.b16 %v960, %v956
    %v997 = vpack.c.b16 %v965, %v961
    %v998 = vpack.c.b16 %v966, %v962
    %v999 = vpack.c.b16 %v967, %v963
    %v1000 = vpack.c.b16 %v968, %v964
    %1033 = vmatprep.subr.bf16.mxu0 %v970
    %1034 = vmatpush1.bf16.msra.mxu0 %v969
    %1035 = vmatprep.subr.bf16.mxu0 %v974
    %1036 = vmatpush1.bf16.msra.mxu0 %v973
    %1037 = vmatprep.subr.bf16.mxu0 %v978
    %1038 = vmatpush1.bf16.msra.mxu0 %v977
    %1039 = vmatprep.subr.bf16.mxu0 %v982
    %1040 = vmatpush1.bf16.msra.mxu0 %v981
    %1041 = vmatprep.subr.bf16.mxu0 %v986
    %1042 = vmatpush1.bf16.msra.mxu0 %v985
    %1043 = vmatprep.subr.bf16.mxu0 %v990
    %1044 = vmatpush1.bf16.msra.mxu0 %v989
    %1045 = vmatprep.subr.bf16.mxu0 %v994
    %1046 = vmatpush1.bf16.msra.mxu0 %v993
    %1047 = vmatprep.subr.bf16.mxu0 %v998
    %1048 = vmatpush1.bf16.msra.mxu0 %v997
    %1049 = vmatprep.subr.bf16.mxu0 0
    %1050 = vmatpush1.bf16.msra.mxu0 0
    %1051 = vmatprep.subr.bf16.mxu0 0
    %1052 = vmatpush1.bf16.msra.mxu0 0
    %1053 = vmatprep.subr.bf16.mxu0 0
    %1054 = vmatpush1.bf16.msra.mxu0 0
    %1055 = vmatprep.subr.bf16.mxu0 0
    %1056 = vmatpush1.bf16.msra.mxu0 0
    %1057 = vmatprep.subr.bf16.mxu0 0
    %1058 = vmatpush1.bf16.msra.mxu0 0
    %1059 = vmatprep.subr.bf16.mxu0 0
    %1060 = vmatpush1.bf16.msra.mxu0 0
    %1061 = vmatprep.subr.bf16.mxu0 0
    %1062 = vmatpush1.bf16.msra.mxu0 0
    %1063 = vmatprep.subr.bf16.mxu0 0
    %1064 = vmatpush1.bf16.msra.mxu0 0
    %1065 = vmatprep.mubr.bf16.mxu0 0
    %1066 = vmatmul.mubr.bf16.gmra.mrb[0].mxu0 %v815
    %v1067 = vpop.f32.mrb[0].mxu0
    %v1068 = vadd.f32 %v856, %v1067
    %v1069 = vpop.f32.mrb[0].mxu0
    %v1070 = vadd.f32 %v860, %v1069
    %v1071 = vpop.f32.mrb[0].mxu0
    %v1072 = vadd.f32 %v856, %v1071
    %v1073 = vpop.f32.mrb[0].mxu0
    %v1074 = vadd.f32 %v860, %v1073
    %1075 = vmatprep.mubr.bf16.mxu0 0
    %1076 = vmatmul.mubr.bf16.gmra.mrb[0].mxu0 %v816
    %v1077 = vpop.f32.mrb[0].mxu0
    %v1078 = vadd.f32 %v856, %v1077
    %v1079 = vpop.f32.mrb[0].mxu0
    %v1080 = vadd.f32 %v860, %v1079
    %v1081 = vpop.f32.mrb[0].mxu0
    %v1082 = vadd.f32 %v856, %v1081
    %v1083 = vpop.f32.mrb[0].mxu0
    %v1084 = vadd.f32 %v860, %v1083
    %1085 = vmatprep.mubr.bf16.mxu0 0
    %1086 = vmatmul.mubr.bf16.gmra.mrb[0].mxu0 %v817
    %v1087 = vpop.f32.mrb[0].mxu0
    %v1088 = vadd.f32 %v856, %v1087
    %v1089 = vpop.f32.mrb[0].mxu0
    %v1090 = vadd.f32 %v860, %v1089
    %v1091 = vpop.f32.mrb[0].mxu0
    %v1092 = vadd.f32 %v856, %v1091
    %v1093 = vpop.f32.mrb[0].mxu0
    %v1094 = vadd.f32 %v860, %v1093
    %1095 = vmatprep.mubr.bf16.mxu0 0
    %1096 = vmatmul.mubr.bf16.gmra.mrb[0].mxu0 %v818
    %v1097 = vpop.f32.mrb[0].mxu0
    %v1098 = vadd.f32 %v856, %v1097
    %v1099 = vpop.f32.mrb[0].mxu0
    %v1100 = vadd.f32 %v860, %v1099
    %v1101 = vpop.f32.mrb[0].mxu0
    %v1102 = vadd.f32 %v856, %v1101
    %v1103 = vpop.f32.mrb[0].mxu0
    %v1104 = vadd.f32 %v860, %v1103
    %1105 = vdwg.mxu0
    %1106 = vmatprep.subr.bf16.mxu0 %v972
    %1107 = vmatpush1.bf16.msra.mxu0 %v971
    %1108 = vmatprep.subr.bf16.mxu0 %v976
    %1109 = vmatpush1.bf16.msra.mxu0 %v975
    %1110 = vmatprep.subr.bf16.mxu0 %v980
    %1111 = vmatpush1.bf16.msra.mxu0 %v979
    %1112 = vmatprep.subr.bf16.mxu0 %v984
    %1113 = vmatpush1.bf16.msra.mxu0 %v983
    %1114 = vmatprep.subr.bf16.mxu0 %v988
    %1115 = vmatpush1.bf16.msra.mxu0 %v987
    %1116 = vmatprep.subr.bf16.mxu0 %v992
    %1117 = vmatpush1.bf16.msra.mxu0 %v991
    %1118 = vmatprep.subr.bf16.mxu0 %v996
    %1119 = vmatpush1.bf16.msra.mxu0 %v995
    %1120 = vmatprep.subr.bf16.mxu0 %v1000
    %1121 = vmatpush1.bf16.msra.mxu0 %v999
    %1122 = vmatprep.subr.bf16.mxu0 0
    %1123 = vmatpush1.bf16.msra.mxu0 0
    %1124 = vmatprep.subr.bf16.mxu0 0
    %1125 = vmatpush1.bf16.msra.mxu0 0
    %1126 = vmatprep.subr.bf16.mxu0 0
    %1127 = vmatpush1.bf16.msra.mxu0 0
    %1128 = vmatprep.subr.bf16.mxu0 0
    %1129 = vmatpush1.bf16.msra.mxu0 0
    %1130 = vmatprep.subr.bf16.mxu0 0
    %1131 = vmatpush1.bf16.msra.mxu0 0
    %1132 = vmatprep.subr.bf16.mxu0 0
    %1133 = vmatpush1.bf16.msra.mxu0 0
    %1134 = vmatprep.subr.bf16.mxu0 0
    %1135 = vmatpush1.bf16.msra.mxu0 0
    %1136 = vmatprep.subr.bf16.mxu0 0
    %1137 = vmatpush1.bf16.msra.mxu0 0
    %1138 = vmatprep.mubr.bf16.mxu0 0
    %1139 = vmatmul.mubr.bf16.gmra.mrb[0].mxu0 %v815
    %v1140 = vpop.f32.mrb[0].mxu0
    %v1141 = vadd.f32 %v864, %v1140
    %v1142 = vpop.f32.mrb[0].mxu0
    %v1143 = vadd.f32 %v868, %v1142
    %v1144 = vpop.f32.mrb[0].mxu0
    %v1145 = vadd.f32 %v864, %v1144
    %v1146 = vpop.f32.mrb[0].mxu0
    %v1147 = vadd.f32 %v868, %v1146
    %1148 = vmatprep.mubr.bf16.mxu0 0
    %1149 = vmatmul.mubr.bf16.gmra.mrb[0].mxu0 %v816
    %v1150 = vpop.f32.mrb[0].mxu0
    %v1151 = vadd.f32 %v864, %v1150
    %v1152 = vpop.f32.mrb[0].mxu0
    %v1153 = vadd.f32 %v868, %v1152
    %v1154 = vpop.f32.mrb[0].mxu0
    %v1155 = vadd.f32 %v864, %v1154
    %v1156 = vpop.f32.mrb[0].mxu0
    %v1157 = vadd.f32 %v868, %v1156
    %1158 = vmatprep.mubr.bf16.mxu0 0
    %1159 = vmatmul.mubr.bf16.gmra.mrb[0].mxu0 %v817
    %v1160 = vpop.f32.mrb[0].mxu0
    %v1161 = vadd.f32 %v864, %v1160
    %v1162 = vpop.f32.mrb[0].mxu0
    %v1163 = vadd.f32 %v868, %v1162
    %v1164 = vpop.f32.mrb[0].mxu0
    %v1165 = vadd.f32 %v864, %v1164
    %v1166 = vpop.f32.mrb[0].mxu0
    %v1167 = vadd.f32 %v868, %v1166
    %1168 = vmatprep.mubr.bf16.mxu0 0
    %1169 = vmatmul.mubr.bf16.gmra.mrb[0].mxu0 %v818
    %v1170 = vpop.f32.mrb[0].mxu0
    %v1171 = vadd.f32 %v864, %v1170
    %v1172 = vpop.f32.mrb[0].mxu0
    %v1173 = vadd.f32 %v868, %v1172
    %v1174 = vpop.f32.mrb[0].mxu0
    %v1175 = vadd.f32 %v864, %v1174
    %v1176 = vpop.f32.mrb[0].mxu0
    %v1177 = vadd.f32 %v868, %v1176
    %1178 = vdwg.mxu0
    %1179 = vst [vmem:[#allocation5] sm:$0xff] %v1068
    %1180 = vst [vmem:[#allocation5 + $0x8] sm:$0xff] %v1070
    %1181 = vst [vmem:[#allocation5 + $0x10] sm:$0xff] %v1141
    %1182 = vst [vmem:[#allocation5 + $0x18] sm:$0xff] %v1143
    %1183 = vst [vmem:[#allocation5 + $0x20] sm:$0xff] %v1072
    %1184 = vst [vmem:[#allocation5 + $0x28] sm:$0xff] %v1074
    %1185 = vst [vmem:[#allocation5 + $0x30] sm:$0xff] %v1145
    %1186 = vst [vmem:[#allocation5 + $0x38] sm:$0xff] %v1147
    %1187 = vst [vmem:[#allocation5 + $0x40] sm:$0xff] %v1078
    %1188 = vst [vmem:[#allocation5 + $0x48] sm:$0xff] %v1080
    %1189 = vst [vmem:[#allocation5 + $0x50] sm:$0xff] %v1151
    %1190 = vst [vmem:[#allocation5 + $0x58] sm:$0xff] %v1153
    %1191 = vst [vmem:[#allocation5 + $0x60] sm:$0xff] %v1082
    %1192 = vst [vmem:[#allocation5 + $0x68] sm:$0xff] %v1084
    %1193 = vst [vmem:[#allocation5 + $0x70] sm:$0xff] %v1155
    %1194 = vst [vmem:[#allocation5 + $0x78] sm:$0xff] %v1157
    %1195 = vst [vmem:[#allocation5 + $0x80] sm:$0xff] %v1088
    %1196 = vst [vmem:[#allocation5 + $0x88] sm:$0xff] %v1090
    %1197 = vst [vmem:[#allocation5 + $0x90] sm:$0xff] %v1161
    %1198 = vst [vmem:[#allocation5 + $0x98] sm:$0xff] %v1163
    %1199 = vst [vmem:[#allocation5 + $0xa0] sm:$0xff] %v1092
    %1200 = vst [vmem:[#allocation5 + $0xa8] sm:$0xff] %v1094
    %1201 = vst [vmem:[#allocation5 + $0xb0] sm:$0xff] %v1165
    %1202 = vst [vmem:[#allocation5 + $0xb8] sm:$0xff] %v1167
    %1203 = vst [vmem:[#allocation5 + $0xc0] sm:$0xff] %v1098
    %1204 = vst [vmem:[#allocation5 + $0xc8] sm:$0xff] %v1100
    %1205 = vst [vmem:[#allocation5 + $0xd0] sm:$0xff] %v1171
    %1206 = vst [vmem:[#allocation5 + $0xd8] sm:$0xff] %v1173
    %1207 = vst [vmem:[#allocation5 + $0xe0] sm:$0xff] %v1102
    %1208 = vst [vmem:[#allocation5 + $0xe8] sm:$0xff] %v1104
    %1209 = vst [vmem:[#allocation5 + $0xf0] sm:$0xff] %v1175
    %1210 = vst [vmem:[#allocation5 + $0xf8] sm:$0xff] %v1177
    %1211 = vst [vmem:[#allocation2] sm:$0xff] 0.0
    %1212 = vst [vmem:[#allocation3] sm:$0xff] 0.0
    %v1213 = vld [vmem:[#allocation12] sm:$0xff]
    %v1214 = vld [vmem:[#allocation12 + $0x8] sm:$0xff]
    %v1215 = vld [vmem:[#allocation12 + $0x10] sm:$0xff]
    %v1216 = vld [vmem:[#allocation12 + $0x18] sm:$0xff]
    %v1217 = vld [vmem:[#allocation12 + $0x20] sm:$0xff]
    %v1218 = vld [vmem:[#allocation12 + $0x28] sm:$0xff]
    %v1219 = vld [vmem:[#allocation12 + $0x30] sm:$0xff]
    %v1220 = vld [vmem:[#allocation12 + $0x38] sm:$0xff]
    %v1221 = vld [vmem:[#allocation12 + $0x40] sm:$0xff]
    %v1222 = vld [vmem:[#allocation12 + $0x48] sm:$0xff]
    %v1223 = vld [vmem:[#allocation12 + $0x50] sm:$0xff]
    %v1224 = vld [vmem:[#allocation12 + $0x58] sm:$0xff]
    %v1225 = vld [vmem:[#allocation12 + $0x60] sm:$0xff]
    %v1226 = vld [vmem:[#allocation12 + $0x68] sm:$0xff]
    %v1227 = vld [vmem:[#allocation12 + $0x70] sm:$0xff]
    %v1228 = vld [vmem:[#allocation12 + $0x78] sm:$0xff]
    %v1229 = vld [vmem:[#allocation12 + $0x80] sm:$0xff]
    %v1230 = vld [vmem:[#allocation12 + $0x88] sm:$0xff]
    %v1231 = vld [vmem:[#allocation12 + $0x90] sm:$0xff]
    %v1232 = vld [vmem:[#allocation12 + $0x98] sm:$0xff]
    %v1233 = vld [vmem:[#allocation12 + $0xa0] sm:$0xff]
    %v1234 = vld [vmem:[#allocation12 + $0xa8] sm:$0xff]
    %v1235 = vld [vmem:[#allocation12 + $0xb0] sm:$0xff]
    %v1236 = vld [vmem:[#allocation12 + $0xb8] sm:$0xff]
    %v1237 = vld [vmem:[#allocation12 + $0xc0] sm:$0xff]
    %v1238 = vld [vmem:[#allocation12 + $0xc8] sm:$0xff]
    %v1239 = vld [vmem:[#allocation12 + $0xd0] sm:$0xff]
    %v1240 = vld [vmem:[#allocation12 + $0xd8] sm:$0xff]
    %v1241 = vld [vmem:[#allocation12 + $0xe0] sm:$0xff]
    %v1242 = vld [vmem:[#allocation12 + $0xe8] sm:$0xff]
    %v1243 = vld [vmem:[#allocation12 + $0xf0] sm:$0xff]
    %v1244 = vld [vmem:[#allocation12 + $0xf8] sm:$0xff]
    // While loop
    $region89: #{tpu_custom_call.1} parent=1 // loop_pre_header
      _
    $region90: #{tpu_custom_call.1} parent=1 // loop_header
      %s1246 = sphi 0, %s1248
      %p1247 = scmp.ge.s32.totalorder %s1246, %s124
    $region91: #{tpu_custom_call.1} parent=1 // loop_header_branch
      %1250 = sbr.rel (%p1247) target = $region95
    $region92: #{tpu_custom_call.1} parent=1 // loop_body
      %v1251 = vstv %s1246
      %vm1252 = vcmp.lt.s32.totalorder %v1251, %v125
      %v1253 = vsel %vm1252, 1, 0
      %1254 = vset.pattern.permute.xlu0 0
      %1255 = vperm.xlu0 %1254, %v1253
      %v1256 = vpop.permute.xlu0 %1255
      %vm1257 = vcmp.eq.s32.totalorder %v1256, 1
      %s1258 = smul.u32 %s1246, 8
      %v1259 = vld [vmem:[#allocation2] sm:$0xff]
      %v1260 = vld [vmem:[#allocation3] sm:$0xff]
      %s1261 = sshra.s32 %s1258, 3
      %s1262 = sand.u32 %s1258, 7
      %s1263 = smul.u32 %s1261, 4
      %s1264 = smul.addr %s1263, 8
      %s1265 = scalar_lea.vmem [#allocation5], %s1264
      %v1266 = vld [vmem:[%s1265] sm:$0xff]
      %v1267 = vld [vmem:[%s1265 + $0x8] sm:$0xff]
      %v1268 = vld [vmem:[%s1265 + $0x10] sm:$0xff]
      %v1269 = vld [vmem:[%s1265 + $0x18] sm:$0xff]
      %v1270 = vpack.c.bf16 %v1259, %v1259
      %v1303 = vunpack.c.l.b16 %v1213
      %v1304 = vunpack.c.h.b16 %v1213
      %v1305 = vunpack.c.l.b16 %v1214
      %v1306 = vunpack.c.h.b16 %v1214
      %v1307 = vunpack.c.l.b16 %v1215
      %v1308 = vunpack.c.h.b16 %v1215
      %v1309 = vunpack.c.l.b16 %v1216
      %v1310 = vunpack.c.h.b16 %v1216
      %v1311 = vunpack.c.l.b16 %v1217
      %v1312 = vunpack.c.h.b16 %v1217
      %v1313 = vunpack.c.l.b16 %v1218
      %v1314 = vunpack.c.h.b16 %v1218
      %v1315 = vunpack.c.l.b16 %v1219
      %v1316 = vunpack.c.h.b16 %v1219
      %v1317 = vunpack.c.l.b16 %v1220
      %v1318 = vunpack.c.h.b16 %v1220
      %v1319 = vunpack.c.l.b16 %v1221
      %v1320 = vunpack.c.h.b16 %v1221
      %v1321 = vunpack.c.l.b16 %v1222
      %v1322 = vunpack.c.h.b16 %v1222
      %v1323 = vunpack.c.l.b16 %v1223
      %v1324 = vunpack.c.h.b16 %v1223
      %v1325 = vunpack.c.l.b16 %v1224
      %v1326 = vunpack.c.h.b16 %v1224
      %v1327 = vunpack.c.l.b16 %v1225
      %v1328 = vunpack.c.h.b16 %v1225
      %v1329 = vunpack.c.l.b16 %v1226
      %v1330 = vunpack.c.h.b16 %v1226
      %v1331 = vunpack.c.l.b16 %v1227
      %v1332 = vunpack.c.h.b16 %v1227
      %v1333 = vunpack.c.l.b16 %v1228
      %v1334 = vunpack.c.h.b16 %v1228
      %v1335 = vunpack.c.l.b16 %v1229
      %v1336 = vunpack.c.h.b16 %v1229
      %v1337 = vunpack.c.l.b16 %v1230
      %v1338 = vunpack.c.h.b16 %v1230
      %v1339 = vunpack.c.l.b16 %v1231
      %v1340 = vunpack.c.h.b16 %v1231
      %v1341 = vunpack.c.l.b16 %v1232
      %v1342 = vunpack.c.h.b16 %v1232
      %v1343 = vunpack.c.l.b16 %v1233
      %v1344 = vunpack.c.h.b16 %v1233
      %v1345 = vunpack.c.l.b16 %v1234
      %v1346 = vunpack.c.h.b16 %v1234
      %v1347 = vunpack.c.l.b16 %v1235
      %v1348 = vunpack.c.h.b16 %v1235
      %v1349 = vunpack.c.l.b16 %v1236
      %v1350 = vunpack.c.h.b16 %v1236
      %v1351 = vunpack.c.l.b16 %v1237
      %v1352 = vunpack.c.h.b16 %v1237
      %v1353 = vunpack.c.l.b16 %v1238
      %v1354 = vunpack.c.h.b16 %v1238
      %v1355 = vunpack.c.l.b16 %v1239
      %v1356 = vunpack.c.h.b16 %v1239
      %v1357 = vunpack.c.l.b16 %v1240
      %v1358 = vunpack.c.h.b16 %v1240
      %v1359 = vunpack.c.l.b16 %v1241
      %v1360 = vunpack.c.h.b16 %v1241
      %v1361 = vunpack.c.l.b16 %v1242
      %v1362 = vunpack.c.h.b16 %v1242
      %v1363 = vunpack.c.l.b16 %v1243
      %v1364 = vunpack.c.h.b16 %v1243
      %v1365 = vunpack.c.l.b16 %v1244
      %v1366 = vunpack.c.h.b16 %v1244
      %v1367 = vpack.c.b16 %v1307, %v1303
      %v1368 = vpack.c.b16 %v1308, %v1304
      %v1369 = vpack.c.b16 %v1309, %v1305
      %v1370 = vpack.c.b16 %v1310, %v1306
      %v1371 = vpack.c.b16 %v1315, %v1311
      %v1372 = vpack.c.b16 %v1316, %v1312
      %v1373 = vpack.c.b16 %v1317, %v1313
      %v1374 = vpack.c.b16 %v1318, %v1314
      %v1375 = vpack.c.b16 %v1323, %v1319
      %v1376 = vpack.c.b16 %v1324, %v1320
      %v1377 = vpack.c.b16 %v1325, %v1321
      %v1378 = vpack.c.b16 %v1326, %v1322
      %v1379 = vpack.c.b16 %v1331, %v1327
      %v1380 = vpack.c.b16 %v1332, %v1328
      %v1381 = vpack.c.b16 %v1333, %v1329
      %v1382 = vpack.c.b16 %v1334, %v1330
      %v1383 = vpack.c.b16 %v1339, %v1335
      %v1384 = vpack.c.b16 %v1340, %v1336
      %v1385 = vpack.c.b16 %v1341, %v1337
      %v1386 = vpack.c.b16 %v1342, %v1338
      %v1387 = vpack.c.b16 %v1347, %v1343
      %v1388 = vpack.c.b16 %v1348, %v1344
      %v1389 = vpack.c.b16 %v1349, %v1345
      %v1390 = vpack.c.b16 %v1350, %v1346
      %v1391 = vpack.c.b16 %v1355, %v1351
      %v1392 = vpack.c.b16 %v1356, %v1352
      %v1393 = vpack.c.b16 %v1357, %v1353
      %v1394 = vpack.c.b16 %v1358, %v1354
      %v1395 = vpack.c.b16 %v1363, %v1359
      %v1396 = vpack.c.b16 %v1364, %v1360
      %v1397 = vpack.c.b16 %v1365, %v1361
      %v1398 = vpack.c.b16 %v1366, %v1362
      %1431 = vmatprep.subr.bf16.mxu0 %v1368
      %1432 = vmatpush1.bf16.msra.mxu0 %v1367
      %1433 = vmatprep.subr.bf16.mxu0 %v1372
      %1434 = vmatpush1.bf16.msra.mxu0 %v1371
      %1435 = vmatprep.subr.bf16.mxu0 %v1376
      %1436 = vmatpush1.bf16.msra.mxu0 %v1375
      %1437 = vmatprep.subr.bf16.mxu0 %v1380
      %1438 = vmatpush1.bf16.msra.mxu0 %v1379
      %1439 = vmatprep.subr.bf16.mxu0 %v1384
      %1440 = vmatpush1.bf16.msra.mxu0 %v1383
      %1441 = vmatprep.subr.bf16.mxu0 %v1388
      %1442 = vmatpush1.bf16.msra.mxu0 %v1387
      %1443 = vmatprep.subr.bf16.mxu0 %v1392
      %1444 = vmatpush1.bf16.msra.mxu0 %v1391
      %1445 = vmatprep.subr.bf16.mxu0 %v1396
      %1446 = vmatpush1.bf16.msra.mxu0 %v1395
      %1447 = vmatprep.subr.bf16.mxu0 0
      %1448 = vmatpush1.bf16.msra.mxu0 0
      %1449 = vmatprep.subr.bf16.mxu0 0
      %1450 = vmatpush1.bf16.msra.mxu0 0
      %1451 = vmatprep.subr.bf16.mxu0 0
      %1452 = vmatpush1.bf16.msra.mxu0 0
      %1453 = vmatprep.subr.bf16.mxu0 0
      %1454 = vmatpush1.bf16.msra.mxu0 0
      %1455 = vmatprep.subr.bf16.mxu0 0
      %1456 = vmatpush1.bf16.msra.mxu0 0
      %1457 = vmatprep.subr.bf16.mxu0 0
      %1458 = vmatpush1.bf16.msra.mxu0 0
      %1459 = vmatprep.subr.bf16.mxu0 0
      %1460 = vmatpush1.bf16.msra.mxu0 0
      %1461 = vmatprep.subr.bf16.mxu0 0
      %1462 = vmatpush1.bf16.msra.mxu0 0
      %1463 = vmatprep.mubr.bf16.mxu0 0
      %1464 = vmatmul.mubr.bf16.gmra.mrb[0].mxu0 %v1270
      %v1465 = vpop.f32.mrb[0].mxu0
      %v1466 = vadd.f32 0.0, %v1465
      %v1467 = vpop.f32.mrb[0].mxu0
      %v1468 = vadd.f32 0.0, %v1467
      %v1469 = vpop.f32.mrb[0].mxu0
      %v1470 = vpop.f32.mrb[0].mxu0
      %1471 = vdwg.mxu0
      %1472 = vmatprep.subr.bf16.mxu0 %v1370
      %1473 = vmatpush1.bf16.msra.mxu0 %v1369
      %1474 = vmatprep.subr.bf16.mxu0 %v1374
      %1475 = vmatpush1.bf16.msra.mxu0 %v1373
      %1476 = vmatprep.subr.bf16.mxu0 %v1378
      %1477 = vmatpush1.bf16.msra.mxu0 %v1377
      %1478 = vmatprep.subr.bf16.mxu0 %v1382
      %1479 = vmatpush1.bf16.msra.mxu0 %v1381
      %1480 = vmatprep.subr.bf16.mxu0 %v1386
      %1481 = vmatpush1.bf16.msra.mxu0 %v1385
      %1482 = vmatprep.subr.bf16.mxu0 %v1390
      %1483 = vmatpush1.bf16.msra.mxu0 %v1389
      %1484 = vmatprep.subr.bf16.mxu0 %v1394
      %1485 = vmatpush1.bf16.msra.mxu0 %v1393
      %1486 = vmatprep.subr.bf16.mxu0 %v1398
      %1487 = vmatpush1.bf16.msra.mxu0 %v1397
      %1488 = vmatprep.subr.bf16.mxu0 0
      %1489 = vmatpush1.bf16.msra.mxu0 0
      %1490 = vmatprep.subr.bf16.mxu0 0
      %1491 = vmatpush1.bf16.msra.mxu0 0
      %1492 = vmatprep.subr.bf16.mxu0 0
      %1493 = vmatpush1.bf16.msra.mxu0 0
      %1494 = vmatprep.subr.bf16.mxu0 0
      %1495 = vmatpush1.bf16.msra.mxu0 0
      %1496 = vmatprep.subr.bf16.mxu0 0
      %1497 = vmatpush1.bf16.msra.mxu0 0
      %1498 = vmatprep.subr.bf16.mxu0 0
      %1499 = vmatpush1.bf16.msra.mxu0 0
      %1500 = vmatprep.subr.bf16.mxu0 0
      %1501 = vmatpush1.bf16.msra.mxu0 0
      %1502 = vmatprep.subr.bf16.mxu0 0
      %1503 = vmatpush1.bf16.msra.mxu0 0
      %1504 = vmatprep.mubr.bf16.mxu0 0
      %1505 = vmatmul.mubr.bf16.gmra.mrb[0].mxu0 %v1270
      %v1506 = vpop.f32.mrb[0].mxu0
      %v1507 = vadd.f32 0.0, %v1506
      %v1508 = vpop.f32.mrb[0].mxu0
      %v1509 = vadd.f32 0.0, %v1508
      %v1510 = vpop.f32.mrb[0].mxu0
      %v1511 = vpop.f32.mrb[0].mxu0
      %1512 = vdwg.mxu0
      %v1513 = vadd.f32 %v1266, %v1466
      %v1514 = vadd.f32 %v1267, %v1468
      %v1515 = vadd.f32 %v1268, %v1507
      %v1516 = vadd.f32 %v1269, %v1509
      %v1517 = vxor.u32 %v1513, 2147483648
      %v1518 = vmul.f32 %v1517, 1.442695
      %v1519 = vpow.pop %v1518
      %v1520 = vadd.f32 %v1519, 1.0
      %v1521 = vrcp.pop %v1520
      %v1522 = vmul.f32 1.0, %v1521
      %v1523 = vxor.u32 %v1514, 2147483648
      %v1524 = vmul.f32 %v1523, 1.442695
      %v1525 = vpow.pop %v1524
      %v1526 = vadd.f32 %v1525, 1.0
      %v1527 = vrcp.pop %v1526
      %v1528 = vmul.f32 1.0, %v1527
      %v1529 = vtanh.pop %v1515
      %v1530 = vxor.u32 %v1516, 2147483648
      %v1531 = vmul.f32 %v1530, 1.442695
      %v1532 = vpow.pop %v1531
      %v1533 = vadd.f32 %v1532, 1.0
      %v1534 = vrcp.pop %v1533
      %v1535 = vmul.f32 1.0, %v1534
      %v1536 = vmul.f32 %v1528, %v1260
      %v1537 = vmul.f32 %v1522, %v1529
      %v1538 = vadd.f32 %v1536, %v1537
      %v1539 = vtanh.pop %v1538
      %v1540 = vmul.f32 %v1535, %v1539
      %v1541 = vsel %vm1257, %v1540, %v1259
      %v1542 = vsel %vm1257, %v1538, %v1260
      %1543 = vst [vmem:[#allocation2] sm:$0xff] %v1541
      %1544 = vst [vmem:[#allocation3] sm:$0xff] %v1542
      %s1545 = scalar_lea.vmem [#allocation4], %s1258
      %1546 = vst [vmem:[%s1545] sm:$0xff] %v1541
    $region93: #{tpu_custom_call.1} parent=1 // loop_footer
      %s1248 = sadd.s32 %s1246, 1
    $region94: #{tpu_custom_call.1} parent=1 // loop_footer_branch
      %1245 = sbr.rel target = $region90
    $region95: #{tpu_custom_call.1} parent=1 // loop_exit
      _
    %v1547 = vld [vmem:[#allocation4] sm:$0xff]
    %v1548 = vld [vmem:[#allocation4 + $0x8] sm:$0xff]
    %v1549 = vld [vmem:[#allocation4 + $0x10] sm:$0xff]
    %v1550 = vld [vmem:[#allocation4 + $0x18] sm:$0xff]
    %v1551 = vld [vmem:[#allocation4 + $0x20] sm:$0xff]
    %v1552 = vld [vmem:[#allocation4 + $0x28] sm:$0xff]
    %v1553 = vld [vmem:[#allocation4 + $0x30] sm:$0xff]
    %v1554 = vld [vmem:[#allocation4 + $0x38] sm:$0xff]
    %v1555 = vpack.c.bf16 %v1548, %v1547
    %v1556 = vpack.c.bf16 %v1550, %v1549
    %v1557 = vpack.c.bf16 %v1552, %v1551
    %v1558 = vpack.c.bf16 %v1554, %v1553
    %v1559 = vld [vmem:[#allocation13] sm:$0xff]
    %v1560 = vld [vmem:[#allocation13 + $0x8] sm:$0xff]
    %v1561 = vld [vmem:[#allocation13 + $0x10] sm:$0xff]
    %v1562 = vld [vmem:[#allocation13 + $0x18] sm:$0xff]
    %v1563 = vld [vmem:[#allocation13 + $0x20] sm:$0xff]
    %v1564 = vld [vmem:[#allocation13 + $0x28] sm:$0xff]
    %v1565 = vld [vmem:[#allocation13 + $0x30] sm:$0xff]
    %v1566 = vld [vmem:[#allocation13 + $0x38] sm:$0xff]
    %v1567 = vld [vmem:[#allocation13 + $0x40] sm:$0xff]
    %v1568 = vld [vmem:[#allocation13 + $0x48] sm:$0xff]
    %v1569 = vld [vmem:[#allocation13 + $0x50] sm:$0xff]
    %v1570 = vld [vmem:[#allocation13 + $0x58] sm:$0xff]
    %v1571 = vld [vmem:[#allocation13 + $0x60] sm:$0xff]
    %v1572 = vld [vmem:[#allocation13 + $0x68] sm:$0xff]
    %v1573 = vld [vmem:[#allocation13 + $0x70] sm:$0xff]
    %v1574 = vld [vmem:[#allocation13 + $0x78] sm:$0xff]
    %v1575 = vld [vmem:[#allocation13 + $0x80] sm:$0xff]
    %v1576 = vld [vmem:[#allocation13 + $0x88] sm:$0xff]
    %v1577 = vld [vmem:[#allocation13 + $0x90] sm:$0xff]
    %v1578 = vld [vmem:[#allocation13 + $0x98] sm:$0xff]
    %v1579 = vld [vmem:[#allocation13 + $0xa0] sm:$0xff]
    %v1580 = vld [vmem:[#allocation13 + $0xa8] sm:$0xff]
    %v1581 = vld [vmem:[#allocation13 + $0xb0] sm:$0xff]
    %v1582 = vld [vmem:[#allocation13 + $0xb8] sm:$0xff]
    %v1583 = vld [vmem:[#allocation13 + $0xc0] sm:$0xff]
    %v1584 = vld [vmem:[#allocation13 + $0xc8] sm:$0xff]
    %v1585 = vld [vmem:[#allocation13 + $0xd0] sm:$0xff]
    %v1586 = vld [vmem:[#allocation13 + $0xd8] sm:$0xff]
    %v1587 = vld [vmem:[#allocation13 + $0xe0] sm:$0xff]
    %v1588 = vld [vmem:[#allocation13 + $0xe8] sm:$0xff]
    %v1589 = vld [vmem:[#allocation13 + $0xf0] sm:$0xff]
    %v1590 = vld [vmem:[#allocation13 + $0xf8] sm:$0xff]
    %v1591 = vld [vmem:[%s11] sm:$0xf]
    %v1593 = vlaneseq
    %v1594 = vshrl.u32 %v1593, 7
    %v1595 = vsub.s32 0, %v1594
    %v1596 = vrot.slane %v1591, %v1595
    %v1597 = vlaneseq
    %v1598 = vshrl.u32 %v1597, 7
    %v1599 = vsub.s32 1, %v1598
    %v1600 = vrot.slane %v1591, %v1599
    %v1601 = vlaneseq
    %v1602 = vshrl.u32 %v1601, 7
    %v1603 = vsub.s32 2, %v1602
    %v1604 = vrot.slane %v1591, %v1603
    %v1605 = vlaneseq
    %v1606 = vshrl.u32 %v1605, 7
    %v1607 = vsub.s32 3, %v1606
    %v1608 = vrot.slane %v1591, %v1607
    %v1645 = vunpack.c.l.b16 %v1559
    %v1646 = vunpack.c.h.b16 %v1559
    %v1647 = vunpack.c.l.b16 %v1560
    %v1648 = vunpack.c.h.b16 %v1560
    %v1649 = vunpack.c.l.b16 %v1561
    %v1650 = vunpack.c.h.b16 %v1561
    %v1651 = vunpack.c.l.b16 %v1562
    %v1652 = vunpack.c.h.b16 %v1562
    %v1653 = vunpack.c.l.b16 %v1563
    %v1654 = vunpack.c.h.b16 %v1563
    %v1655 = vunpack.c.l.b16 %v1564
    %v1656 = vunpack.c.h.b16 %v1564
    %v1657 = vunpack.c.l.b16 %v1565
    %v1658 = vunpack.c.h.b16 %v1565
    %v1659 = vunpack.c.l.b16 %v1566
    %v1660 = vunpack.c.h.b16 %v1566
    %v1661 = vunpack.c.l.b16 %v1567
    %v1662 = vunpack.c.h.b16 %v1567
    %v1663 = vunpack.c.l.b16 %v1568
    %v1664 = vunpack.c.h.b16 %v1568
    %v1665 = vunpack.c.l.b16 %v1569
    %v1666 = vunpack.c.h.b16 %v1569
    %v1667 = vunpack.c.l.b16 %v1570
    %v1668 = vunpack.c.h.b16 %v1570
    %v1669 = vunpack.c.l.b16 %v1571
    %v1670 = vunpack.c.h.b16 %v1571
    %v1671 = vunpack.c.l.b16 %v1572
    %v1672 = vunpack.c.h.b16 %v1572
    %v1673 = vunpack.c.l.b16 %v1573
    %v1674 = vunpack.c.h.b16 %v1573
    %v1675 = vunpack.c.l.b16 %v1574
    %v1676 = vunpack.c.h.b16 %v1574
    %v1677 = vunpack.c.l.b16 %v1575
    %v1678 = vunpack.c.h.b16 %v1575
    %v1679 = vunpack.c.l.b16 %v1576
    %v1680 = vunpack.c.h.b16 %v1576
    %v1681 = vunpack.c.l.b16 %v1577
    %v1682 = vunpack.c.h.b16 %v1577
    %v1683 = vunpack.c.l.b16 %v1578
    %v1684 = vunpack.c.h.b16 %v1578
    %v1685 = vunpack.c.l.b16 %v1579
    %v1686 = vunpack.c.h.b16 %v1579
    %v1687 = vunpack.c.l.b16 %v1580
    %v1688 = vunpack.c.h.b16 %v1580
    %v1689 = vunpack.c.l.b16 %v1581
    %v1690 = vunpack.c.h.b16 %v1581
    %v1691 = vunpack.c.l.b16 %v1582
    %v1692 = vunpack.c.h.b16 %v1582
    %v1693 = vunpack.c.l.b16 %v1583
    %v1694 = vunpack.c.h.b16 %v1583
    %v1695 = vunpack.c.l.b16 %v1584
    %v1696 = vunpack.c.h.b16 %v1584
    %v1697 = vunpack.c.l.b16 %v1585
    %v1698 = vunpack.c.h.b16 %v1585
    %v1699 = vunpack.c.l.b16 %v1586
    %v1700 = vunpack.c.h.b16 %v1586
    %v1701 = vunpack.c.l.b16 %v1587
    %v1702 = vunpack.c.h.b16 %v1587
    %v1703 = vunpack.c.l.b16 %v1588
    %v1704 = vunpack.c.h.b16 %v1588
    %v1705 = vunpack.c.l.b16 %v1589
    %v1706 = vunpack.c.h.b16 %v1589
    %v1707 = vunpack.c.l.b16 %v1590
    %v1708 = vunpack.c.h.b16 %v1590
    %v1709 = vpack.c.b16 %v1649, %v1645
    %v1710 = vpack.c.b16 %v1650, %v1646
    %v1711 = vpack.c.b16 %v1651, %v1647
    %v1712 = vpack.c.b16 %v1652, %v1648
    %v1713 = vpack.c.b16 %v1657, %v1653
    %v1714 = vpack.c.b16 %v1658, %v1654
    %v1715 = vpack.c.b16 %v1659, %v1655
    %v1716 = vpack.c.b16 %v1660, %v1656
    %v1717 = vpack.c.b16 %v1665, %v1661
    %v1718 = vpack.c.b16 %v1666, %v1662
    %v1719 = vpack.c.b16 %v1667, %v1663
    %v1720 = vpack.c.b16 %v1668, %v1664
    %v1721 = vpack.c.b16 %v1673, %v1669
    %v1722 = vpack.c.b16 %v1674, %v1670
    %v1723 = vpack.c.b16 %v1675, %v1671
    %v1724 = vpack.c.b16 %v1676, %v1672
    %v1725 = vpack.c.b16 %v1681, %v1677
    %v1726 = vpack.c.b16 %v1682, %v1678
    %v1727 = vpack.c.b16 %v1683, %v1679
    %v1728 = vpack.c.b16 %v1684, %v1680
    %v1729 = vpack.c.b16 %v1689, %v1685
    %v1730 = vpack.c.b16 %v1690, %v1686
    %v1731 = vpack.c.b16 %v1691, %v1687
    %v1732 = vpack.c.b16 %v1692, %v1688
    %v1733 = vpack.c.b16 %v1697, %v1693
    %v1734 = vpack.c.b16 %v1698, %v1694
    %v1735 = vpack.c.b16 %v1699, %v1695
    %v1736 = vpack.c.b16 %v1700, %v1696
    %v1737 = vpack.c.b16 %v1705, %v1701
    %v1738 = vpack.c.b16 %v1706, %v1702
    %v1739 = vpack.c.b16 %v1707, %v1703
    %v1740 = vpack.c.b16 %v1708, %v1704
    %1773 = vmatprep.subr.bf16.mxu0 %v1710
    %1774 = vmatpush1.bf16.msra.mxu0 %v1709
    %1775 = vmatprep.subr.bf16.mxu0 %v1714
    %1776 = vmatpush1.bf16.msra.mxu0 %v1713
    %1777 = vmatprep.subr.bf16.mxu0 %v1718
    %1778 = vmatpush1.bf16.msra.mxu0 %v1717
    %1779 = vmatprep.subr.bf16.mxu0 %v1722
    %1780 = vmatpush1.bf16.msra.mxu0 %v1721
    %1781 = vmatprep.subr.bf16.mxu0 %v1726
    %1782 = vmatpush1.bf16.msra.mxu0 %v1725
    %1783 = vmatprep.subr.bf16.mxu0 %v1730
    %1784 = vmatpush1.bf16.msra.mxu0 %v1729
    %1785 = vmatprep.subr.bf16.mxu0 %v1734
    %1786 = vmatpush1.bf16.msra.mxu0 %v1733
    %1787 = vmatprep.subr.bf16.mxu0 %v1738
    %1788 = vmatpush1.bf16.msra.mxu0 %v1737
    %1789 = vmatprep.subr.bf16.mxu0 0
    %1790 = vmatpush1.bf16.msra.mxu0 0
    %1791 = vmatprep.subr.bf16.mxu0 0
    %1792 = vmatpush1.bf16.msra.mxu0 0
    %1793 = vmatprep.subr.bf16.mxu0 0
    %1794 = vmatpush1.bf16.msra.mxu0 0
    %1795 = vmatprep.subr.bf16.mxu0 0
    %1796 = vmatpush1.bf16.msra.mxu0 0
    %1797 = vmatprep.subr.bf16.mxu0 0
    %1798 = vmatpush1.bf16.msra.mxu0 0
    %1799 = vmatprep.subr.bf16.mxu0 0
    %1800 = vmatpush1.bf16.msra.mxu0 0
    %1801 = vmatprep.subr.bf16.mxu0 0
    %1802 = vmatpush1.bf16.msra.mxu0 0
    %1803 = vmatprep.subr.bf16.mxu0 0
    %1804 = vmatpush1.bf16.msra.mxu0 0
    %1805 = vmatprep.mubr.bf16.mxu0 0
    %1806 = vmatmul.mubr.bf16.gmra.mrb[0].mxu0 %v1555
    %v1807 = vpop.f32.mrb[0].mxu0
    %v1808 = vadd.f32 %v1596, %v1807
    %v1809 = vpop.f32.mrb[0].mxu0
    %v1810 = vadd.f32 %v1600, %v1809
    %v1811 = vpop.f32.mrb[0].mxu0
    %v1812 = vadd.f32 %v1596, %v1811
    %v1813 = vpop.f32.mrb[0].mxu0
    %v1814 = vadd.f32 %v1600, %v1813
    %1815 = vmatprep.mubr.bf16.mxu0 0
    %1816 = vmatmul.mubr.bf16.gmra.mrb[0].mxu0 %v1556
    %v1817 = vpop.f32.mrb[0].mxu0
    %v1818 = vadd.f32 %v1596, %v1817
    %v1819 = vpop.f32.mrb[0].mxu0
    %v1820 = vadd.f32 %v1600, %v1819
    %v1821 = vpop.f32.mrb[0].mxu0
    %v1822 = vadd.f32 %v1596, %v1821
    %v1823 = vpop.f32.mrb[0].mxu0
    %v1824 = vadd.f32 %v1600, %v1823
    %1825 = vmatprep.mubr.bf16.mxu0 0
    %1826 = vmatmul.mubr.bf16.gmra.mrb[0].mxu0 %v1557
    %v1827 = vpop.f32.mrb[0].mxu0
    %v1828 = vadd.f32 %v1596, %v1827
    %v1829 = vpop.f32.mrb[0].mxu0
    %v1830 = vadd.f32 %v1600, %v1829
    %v1831 = vpop.f32.mrb[0].mxu0
    %v1832 = vadd.f32 %v1596, %v1831
    %v1833 = vpop.f32.mrb[0].mxu0
    %v1834 = vadd.f32 %v1600, %v1833
    %1835 = vmatprep.mubr.bf16.mxu0 0
    %1836 = vmatmul.mubr.bf16.gmra.mrb[0].mxu0 %v1558
    %v1837 = vpop.f32.mrb[0].mxu0
    %v1838 = vadd.f32 %v1596, %v1837
    %v1839 = vpop.f32.mrb[0].mxu0
    %v1840 = vadd.f32 %v1600, %v1839
    %v1841 = vpop.f32.mrb[0].mxu0
    %v1842 = vadd.f32 %v1596, %v1841
    %v1843 = vpop.f32.mrb[0].mxu0
    %v1844 = vadd.f32 %v1600, %v1843
    %1845 = vdwg.mxu0
    %1846 = vmatprep.subr.bf16.mxu0 %v1712
    %1847 = vmatpush1.bf16.msra.mxu0 %v1711
    %1848 = vmatprep.subr.bf16.mxu0 %v1716
    %1849 = vmatpush1.bf16.msra.mxu0 %v1715
    %1850 = vmatprep.subr.bf16.mxu0 %v1720
    %1851 = vmatpush1.bf16.msra.mxu0 %v1719
    %1852 = vmatprep.subr.bf16.mxu0 %v1724
    %1853 = vmatpush1.bf16.msra.mxu0 %v1723
    %1854 = vmatprep.subr.bf16.mxu0 %v1728
    %1855 = vmatpush1.bf16.msra.mxu0 %v1727
    %1856 = vmatprep.subr.bf16.mxu0 %v1732
    %1857 = vmatpush1.bf16.msra.mxu0 %v1731
    %1858 = vmatprep.subr.bf16.mxu0 %v1736
    %1859 = vmatpush1.bf16.msra.mxu0 %v1735
    %1860 = vmatprep.subr.bf16.mxu0 %v1740
    %1861 = vmatpush1.bf16.msra.mxu0 %v1739
    %1862 = vmatprep.subr.bf16.mxu0 0
    %1863 = vmatpush1.bf16.msra.mxu0 0
    %1864 = vmatprep.subr.bf16.mxu0 0
    %1865 = vmatpush1.bf16.msra.mxu0 0
    %1866 = vmatprep.subr.bf16.mxu0 0
    %1867 = vmatpush1.bf16.msra.mxu0 0
    %1868 = vmatprep.subr.bf16.mxu0 0
    %1869 = vmatpush1.bf16.msra.mxu0 0
    %1870 = vmatprep.subr.bf16.mxu0 0
    %1871 = vmatpush1.bf16.msra.mxu0 0
    %1872 = vmatprep.subr.bf16.mxu0 0
    %1873 = vmatpush1.bf16.msra.mxu0 0
    %1874 = vmatprep.subr.bf16.mxu0 0
    %1875 = vmatpush1.bf16.msra.mxu0 0
    %1876 = vmatprep.subr.bf16.mxu0 0
    %1877 = vmatpush1.bf16.msra.mxu0 0
    %1878 = vmatprep.mubr.bf16.mxu0 0
    %1879 = vmatmul.mubr.bf16.gmra.mrb[0].mxu0 %v1555
    %v1880 = vpop.f32.mrb[0].mxu0
    %v1881 = vadd.f32 %v1604, %v1880
    %v1882 = vpop.f32.mrb[0].mxu0
    %v1883 = vadd.f32 %v1608, %v1882
    %v1884 = vpop.f32.mrb[0].mxu0
    %v1885 = vadd.f32 %v1604, %v1884
    %v1886 = vpop.f32.mrb[0].mxu0
    %v1887 = vadd.f32 %v1608, %v1886
    %1888 = vmatprep.mubr.bf16.mxu0 0
    %1889 = vmatmul.mubr.bf16.gmra.mrb[0].mxu0 %v1556
    %v1890 = vpop.f32.mrb[0].mxu0
    %v1891 = vadd.f32 %v1604, %v1890
    %v1892 = vpop.f32.mrb[0].mxu0
    %v1893 = vadd.f32 %v1608, %v1892
    %v1894 = vpop.f32.mrb[0].mxu0
    %v1895 = vadd.f32 %v1604, %v1894
    %v1896 = vpop.f32.mrb[0].mxu0
    %v1897 = vadd.f32 %v1608, %v1896
    %1898 = vmatprep.mubr.bf16.mxu0 0
    %1899 = vmatmul.mubr.bf16.gmra.mrb[0].mxu0 %v1557
    %v1900 = vpop.f32.mrb[0].mxu0
    %v1901 = vadd.f32 %v1604, %v1900
    %v1902 = vpop.f32.mrb[0].mxu0
    %v1903 = vadd.f32 %v1608, %v1902
    %v1904 = vpop.f32.mrb[0].mxu0
    %v1905 = vadd.f32 %v1604, %v1904
    %v1906 = vpop.f32.mrb[0].mxu0
    %v1907 = vadd.f32 %v1608, %v1906
    %1908 = vmatprep.mubr.bf16.mxu0 0
    %1909 = vmatmul.mubr.bf16.gmra.mrb[0].mxu0 %v1558
    %v1910 = vpop.f32.mrb[0].mxu0
    %v1911 = vadd.f32 %v1604, %v1910
    %v1912 = vpop.f32.mrb[0].mxu0
    %v1913 = vadd.f32 %v1608, %v1912
    %v1914 = vpop.f32.mrb[0].mxu0
    %v1915 = vadd.f32 %v1604, %v1914
    %v1916 = vpop.f32.mrb[0].mxu0
    %v1917 = vadd.f32 %v1608, %v1916
    %1918 = vdwg.mxu0
    %1919 = vst [vmem:[#allocation5] sm:$0xff] %v1808
    %1920 = vst [vmem:[#allocation5 + $0x8] sm:$0xff] %v1810
    %1921 = vst [vmem:[#allocation5 + $0x10] sm:$0xff] %v1881
    %1922 = vst [vmem:[#allocation5 + $0x18] sm:$0xff] %v1883
    %1923 = vst [vmem:[#allocation5 + $0x20] sm:$0xff] %v1812
    %1924 = vst [vmem:[#allocation5 + $0x28] sm:$0xff] %v1814
    %1925 = vst [vmem:[#allocation5 + $0x30] sm:$0xff] %v1885
    %1926 = vst [vmem:[#allocation5 + $0x38] sm:$0xff] %v1887
    %1927 = vst [vmem:[#allocation5 + $0x40] sm:$0xff] %v1818
    %1928 = vst [vmem:[#allocation5 + $0x48] sm:$0xff] %v1820
    %1929 = vst [vmem:[#allocation5 + $0x50] sm:$0xff] %v1891
    %1930 = vst [vmem:[#allocation5 + $0x58] sm:$0xff] %v1893
    %1931 = vst [vmem:[#allocation5 + $0x60] sm:$0xff] %v1822
    %1932 = vst [vmem:[#allocation5 + $0x68] sm:$0xff] %v1824
    %1933 = vst [vmem:[#allocation5 + $0x70] sm:$0xff] %v1895
    %1934 = vst [vmem:[#allocation5 + $0x78] sm:$0xff] %v1897
    %1935 = vst [vmem:[#allocation5 + $0x80] sm:$0xff] %v1828
    %1936 = vst [vmem:[#allocation5 + $0x88] sm:$0xff] %v1830
    %1937 = vst [vmem:[#allocation5 + $0x90] sm:$0xff] %v1901
    %1938 = vst [vmem:[#allocation5 + $0x98] sm:$0xff] %v1903
    %1939 = vst [vmem:[#allocation5 + $0xa0] sm:$0xff] %v1832
    %1940 = vst [vmem:[#allocation5 + $0xa8] sm:$0xff] %v1834
    %1941 = vst [vmem:[#allocation5 + $0xb0] sm:$0xff] %v1905
    %1942 = vst [vmem:[#allocation5 + $0xb8] sm:$0xff] %v1907
    %1943 = vst [vmem:[#allocation5 + $0xc0] sm:$0xff] %v1838
    %1944 = vst [vmem:[#allocation5 + $0xc8] sm:$0xff] %v1840
    %1945 = vst [vmem:[#allocation5 + $0xd0] sm:$0xff] %v1911
    %1946 = vst [vmem:[#allocation5 + $0xd8] sm:$0xff] %v1913
    %1947 = vst [vmem:[#allocation5 + $0xe0] sm:$0xff] %v1842
    %1948 = vst [vmem:[#allocation5 + $0xe8] sm:$0xff] %v1844
    %1949 = vst [vmem:[#allocation5 + $0xf0] sm:$0xff] %v1915
    %1950 = vst [vmem:[#allocation5 + $0xf8] sm:$0xff] %v1917
    %1951 = vst [vmem:[#allocation2] sm:$0xff] 0.0
    %1952 = vst [vmem:[#allocation3] sm:$0xff] 0.0
    %v1953 = vld [vmem:[#allocation15] sm:$0xff]
    %v1954 = vld [vmem:[#allocation15 + $0x8] sm:$0xff]
    %v1955 = vld [vmem:[#allocation15 + $0x10] sm:$0xff]
    %v1956 = vld [vmem:[#allocation15 + $0x18] sm:$0xff]
    %v1957 = vld [vmem:[#allocation15 + $0x20] sm:$0xff]
    %v1958 = vld [vmem:[#allocation15 + $0x28] sm:$0xff]
    %v1959 = vld [vmem:[#allocation15 + $0x30] sm:$0xff]
    %v1960 = vld [vmem:[#allocation15 + $0x38] sm:$0xff]
    %v1961 = vld [vmem:[#allocation15 + $0x40] sm:$0xff]
    %v1962 = vld [vmem:[#allocation15 + $0x48] sm:$0xff]
    %v1963 = vld [vmem:[#allocation15 + $0x50] sm:$0xff]
    %v1964 = vld [vmem:[#allocation15 + $0x58] sm:$0xff]
    %v1965 = vld [vmem:[#allocation15 + $0x60] sm:$0xff]
    %v1966 = vld [vmem:[#allocation15 + $0x68] sm:$0xff]
    %v1967 = vld [vmem:[#allocation15 + $0x70] sm:$0xff]
    %v1968 = vld [vmem:[#allocation15 + $0x78] sm:$0xff]
    %v1969 = vld [vmem:[#allocation15 + $0x80] sm:$0xff]
    %v1970 = vld [vmem:[#allocation15 + $0x88] sm:$0xff]
    %v1971 = vld [vmem:[#allocation15 + $0x90] sm:$0xff]
    %v1972 = vld [vmem:[#allocation15 + $0x98] sm:$0xff]
    %v1973 = vld [vmem:[#allocation15 + $0xa0] sm:$0xff]
    %v1974 = vld [vmem:[#allocation15 + $0xa8] sm:$0xff]
    %v1975 = vld [vmem:[#allocation15 + $0xb0] sm:$0xff]
    %v1976 = vld [vmem:[#allocation15 + $0xb8] sm:$0xff]
    %v1977 = vld [vmem:[#allocation15 + $0xc0] sm:$0xff]
    %v1978 = vld [vmem:[#allocation15 + $0xc8] sm:$0xff]
    %v1979 = vld [vmem:[#allocation15 + $0xd0] sm:$0xff]
    %v1980 = vld [vmem:[#allocation15 + $0xd8] sm:$0xff]
    %v1981 = vld [vmem:[#allocation15 + $0xe0] sm:$0xff]
    %v1982 = vld [vmem:[#allocation15 + $0xe8] sm:$0xff]
    %v1983 = vld [vmem:[#allocation15 + $0xf0] sm:$0xff]
    %v1984 = vld [vmem:[#allocation15 + $0xf8] sm:$0xff]
    // While loop
    $region96: #{tpu_custom_call.1} parent=1 // loop_pre_header
      _
    $region97: #{tpu_custom_call.1} parent=1 // loop_header
      %s1986 = sphi 0, %s1988
      %p1987 = scmp.ge.s32.totalorder %s1986, %s124
    $region98: #{tpu_custom_call.1} parent=1 // loop_header_branch
      %1990 = sbr.rel (%p1987) target = $region102
    $region99: #{tpu_custom_call.1} parent=1 // loop_body
      %v1991 = vstv %s1986
      %vm1992 = vcmp.lt.s32.totalorder %v1991, %v125
      %v1993 = vsel %vm1992, 1, 0
      %1994 = vset.pattern.permute.xlu0 0
      %1995 = vperm.xlu0 %1994, %v1993
      %v1996 = vpop.permute.xlu0 %1995
      %vm1997 = vcmp.eq.s32.totalorder %v1996, 1
      %s1998 = smul.u32 %s1986, 8
      %v1999 = vld [vmem:[#allocation2] sm:$0xff]
      %v2000 = vld [vmem:[#allocation3] sm:$0xff]
      %s2001 = sshra.s32 %s1998, 3
      %s2002 = sand.u32 %s1998, 7
      %s2003 = smul.u32 %s2001, 4
      %s2004 = smul.addr %s2003, 8
      %s2005 = scalar_lea.vmem [#allocation5], %s2004
      %v2006 = vld [vmem:[%s2005] sm:$0xff]
      %v2007 = vld [vmem:[%s2005 + $0x8] sm:$0xff]
      %v2008 = vld [vmem:[%s2005 + $0x10] sm:$0xff]
      %v2009 = vld [vmem:[%s2005 + $0x18] sm:$0xff]
      %v2010 = vpack.c.bf16 %v1999, %v1999
      %v2043 = vunpack.c.l.b16 %v1953
      %v2044 = vunpack.c.h.b16 %v1953
      %v2045 = vunpack.c.l.b16 %v1954
      %v2046 = vunpack.c.h.b16 %v1954
      %v2047 = vunpack.c.l.b16 %v1955
      %v2048 = vunpack.c.h.b16 %v1955
      %v2049 = vunpack.c.l.b16 %v1956
      %v2050 = vunpack.c.h.b16 %v1956
      %v2051 = vunpack.c.l.b16 %v1957
      %v2052 = vunpack.c.h.b16 %v1957
      %v2053 = vunpack.c.l.b16 %v1958
      %v2054 = vunpack.c.h.b16 %v1958
      %v2055 = vunpack.c.l.b16 %v1959
      %v2056 = vunpack.c.h.b16 %v1959
      %v2057 = vunpack.c.l.b16 %v1960
      %v2058 = vunpack.c.h.b16 %v1960
      %v2059 = vunpack.c.l.b16 %v1961
      %v2060 = vunpack.c.h.b16 %v1961
      %v2061 = vunpack.c.l.b16 %v1962
      %v2062 = vunpack.c.h.b16 %v1962
      %v2063 = vunpack.c.l.b16 %v1963
      %v2064 = vunpack.c.h.b16 %v1963
      %v2065 = vunpack.c.l.b16 %v1964
      %v2066 = vunpack.c.h.b16 %v1964
      %v2067 = vunpack.c.l.b16 %v1965
      %v2068 = vunpack.c.h.b16 %v1965
      %v2069 = vunpack.c.l.b16 %v1966
      %v2070 = vunpack.c.h.b16 %v1966
      %v2071 = vunpack.c.l.b16 %v1967
      %v2072 = vunpack.c.h.b16 %v1967
      %v2073 = vunpack.c.l.b16 %v1968
      %v2074 = vunpack.c.h.b16 %v1968
      %v2075 = vunpack.c.l.b16 %v1969
      %v2076 = vunpack.c.h.b16 %v1969
      %v2077 = vunpack.c.l.b16 %v1970
      %v2078 = vunpack.c.h.b16 %v1970
      %v2079 = vunpack.c.l.b16 %v1971
      %v2080 = vunpack.c.h.b16 %v1971
      %v2081 = vunpack.c.l.b16 %v1972
      %v2082 = vunpack.c.h.b16 %v1972
      %v2083 = vunpack.c.l.b16 %v1973
      %v2084 = vunpack.c.h.b16 %v1973
      %v2085 = vunpack.c.l.b16 %v1974
      %v2086 = vunpack.c.h.b16 %v1974
      %v2087 = vunpack.c.l.b16 %v1975
      %v2088 = vunpack.c.h.b16 %v1975
      %v2089 = vunpack.c.l.b16 %v1976
      %v2090 = vunpack.c.h.b16 %v1976
      %v2091 = vunpack.c.l.b16 %v1977
      %v2092 = vunpack.c.h.b16 %v1977
      %v2093 = vunpack.c.l.b16 %v1978
      %v2094 = vunpack.c.h.b16 %v1978
      %v2095 = vunpack.c.l.b16 %v1979
      %v2096 = vunpack.c.h.b16 %v1979
      %v2097 = vunpack.c.l.b16 %v1980
      %v2098 = vunpack.c.h.b16 %v1980
      %v2099 = vunpack.c.l.b16 %v1981
      %v2100 = vunpack.c.h.b16 %v1981
      %v2101 = vunpack.c.l.b16 %v1982
      %v2102 = vunpack.c.h.b16 %v1982
      %v2103 = vunpack.c.l.b16 %v1983
      %v2104 = vunpack.c.h.b16 %v1983
      %v2105 = vunpack.c.l.b16 %v1984
      %v2106 = vunpack.c.h.b16 %v1984
      %v2107 = vpack.c.b16 %v2047, %v2043
      %v2108 = vpack.c.b16 %v2048, %v2044
      %v2109 = vpack.c.b16 %v2049, %v2045
      %v2110 = vpack.c.b16 %v2050, %v2046
      %v2111 = vpack.c.b16 %v2055, %v2051
      %v2112 = vpack.c.b16 %v2056, %v2052
      %v2113 = vpack.c.b16 %v2057, %v2053
      %v2114 = vpack.c.b16 %v2058, %v2054
      %v2115 = vpack.c.b16 %v2063, %v2059
      %v2116 = vpack.c.b16 %v2064, %v2060
      %v2117 = vpack.c.b16 %v2065, %v2061
      %v2118 = vpack.c.b16 %v2066, %v2062
      %v2119 = vpack.c.b16 %v2071, %v2067
      %v2120 = vpack.c.b16 %v2072, %v2068
      %v2121 = vpack.c.b16 %v2073, %v2069
      %v2122 = vpack.c.b16 %v2074, %v2070
      %v2123 = vpack.c.b16 %v2079, %v2075
      %v2124 = vpack.c.b16 %v2080, %v2076
      %v2125 = vpack.c.b16 %v2081, %v2077
      %v2126 = vpack.c.b16 %v2082, %v2078
      %v2127 = vpack.c.b16 %v2087, %v2083
      %v2128 = vpack.c.b16 %v2088, %v2084
      %v2129 = vpack.c.b16 %v2089, %v2085
      %v2130 = vpack.c.b16 %v2090, %v2086
      %v2131 = vpack.c.b16 %v2095, %v2091
      %v2132 = vpack.c.b16 %v2096, %v2092
      %v2133 = vpack.c.b16 %v2097, %v2093
      %v2134 = vpack.c.b16 %v2098, %v2094
      %v2135 = vpack.c.b16 %v2103, %v2099
      %v2136 = vpack.c.b16 %v2104, %v2100
      %v2137 = vpack.c.b16 %v2105, %v2101
      %v2138 = vpack.c.b16 %v2106, %v2102
      %2171 = vmatprep.subr.bf16.mxu0 %v2108
      %2172 = vmatpush1.bf16.msra.mxu0 %v2107
      %2173 = vmatprep.subr.bf16.mxu0 %v2112
      %2174 = vmatpush1.bf16.msra.mxu0 %v2111
      %2175 = vmatprep.subr.bf16.mxu0 %v2116
      %2176 = vmatpush1.bf16.msra.mxu0 %v2115
      %2177 = vmatprep.subr.bf16.mxu0 %v2120
      %2178 = vmatpush1.bf16.msra.mxu0 %v2119
      %2179 = vmatprep.subr.bf16.mxu0 %v2124
      %2180 = vmatpush1.bf16.msra.mxu0 %v2123
      %2181 = vmatprep.subr.bf16.mxu0 %v2128
      %2182 = vmatpush1.bf16.msra.mxu0 %v2127
      %2183 = vmatprep.subr.bf16.mxu0 %v2132
      %2184 = vmatpush1.bf16.msra.mxu0 %v2131
      %2185 = vmatprep.subr.bf16.mxu0 %v2136
      %2186 = vmatpush1.bf16.msra.mxu0 %v2135
      %2187 = vmatprep.subr.bf16.mxu0 0
      %2188 = vmatpush1.bf16.msra.mxu0 0
      %2189 = vmatprep.subr.bf16.mxu0 0
      %2190 = vmatpush1.bf16.msra.mxu0 0
      %2191 = vmatprep.subr.bf16.mxu0 0
      %2192 = vmatpush1.bf16.msra.mxu0 0
      %2193 = vmatprep.subr.bf16.mxu0 0
      %2194 = vmatpush1.bf16.msra.mxu0 0
      %2195 = vmatprep.subr.bf16.mxu0 0
      %2196 = vmatpush1.bf16.msra.mxu0 0
      %2197 = vmatprep.subr.bf16.mxu0 0
      %2198 = vmatpush1.bf16.msra.mxu0 0
      %2199 = vmatprep.subr.bf16.mxu0 0
      %2200 = vmatpush1.bf16.msra.mxu0 0
      %2201 = vmatprep.subr.bf16.mxu0 0
      %2202 = vmatpush1.bf16.msra.mxu0 0
      %2203 = vmatprep.mubr.bf16.mxu0 0
      %2204 = vmatmul.mubr.bf16.gmra.mrb[0].mxu0 %v2010
      %v2205 = vpop.f32.mrb[0].mxu0
      %v2206 = vadd.f32 0.0, %v2205
      %v2207 = vpop.f32.mrb[0].mxu0
      %v2208 = vadd.f32 0.0, %v2207
      %v2209 = vpop.f32.mrb[0].mxu0
      %v2210 = vpop.f32.mrb[0].mxu0
      %2211 = vdwg.mxu0
      %2212 = vmatprep.subr.bf16.mxu0 %v2110
      %2213 = vmatpush1.bf16.msra.mxu0 %v2109
      %2214 = vmatprep.subr.bf16.mxu0 %v2114
      %2215 = vmatpush1.bf16.msra.mxu0 %v2113
      %2216 = vmatprep.subr.bf16.mxu0 %v2118
      %2217 = vmatpush1.bf16.msra.mxu0 %v2117
      %2218 = vmatprep.subr.bf16.mxu0 %v2122
      %2219 = vmatpush1.bf16.msra.mxu0 %v2121
      %2220 = vmatprep.subr.bf16.mxu0 %v2126
      %2221 = vmatpush1.bf16.msra.mxu0 %v2125
      %2222 = vmatprep.subr.bf16.mxu0 %v2130
      %2223 = vmatpush1.bf16.msra.mxu0 %v2129
      %2224 = vmatprep.subr.bf16.mxu0 %v2134
      %2225 = vmatpush1.bf16.msra.mxu0 %v2133
      %2226 = vmatprep.subr.bf16.mxu0 %v2138
      %2227 = vmatpush1.bf16.msra.mxu0 %v2137
      %2228 = vmatprep.subr.bf16.mxu0 0
      %2229 = vmatpush1.bf16.msra.mxu0 0
      %2230 = vmatprep.subr.bf16.mxu0 0
      %2231 = vmatpush1.bf16.msra.mxu0 0
      %2232 = vmatprep.subr.bf16.mxu0 0
      %2233 = vmatpush1.bf16.msra.mxu0 0
      %2234 = vmatprep.subr.bf16.mxu0 0
      %2235 = vmatpush1.bf16.msra.mxu0 0
      %2236 = vmatprep.subr.bf16.mxu0 0
      %2237 = vmatpush1.bf16.msra.mxu0 0
      %2238 = vmatprep.subr.bf16.mxu0 0
      %2239 = vmatpush1.bf16.msra.mxu0 0
      %2240 = vmatprep.subr.bf16.mxu0 0
      %2241 = vmatpush1.bf16.msra.mxu0 0
      %2242 = vmatprep.subr.bf16.mxu0 0
      %2243 = vmatpush1.bf16.msra.mxu0 0
      %2244 = vmatprep.mubr.bf16.mxu0 0
      %2245 = vmatmul.mubr.bf16.gmra.mrb[0].mxu0 %v2010
      %v2246 = vpop.f32.mrb[0].mxu0
      %v2247 = vadd.f32 0.0, %v2246
      %v2248 = vpop.f32.mrb[0].mxu0
      %v2249 = vadd.f32 0.0, %v2248
      %v2250 = vpop.f32.mrb[0].mxu0
      %v2251 = vpop.f32.mrb[0].mxu0
      %2252 = vdwg.mxu0
      %v2253 = vadd.f32 %v2006, %v2206
      %v2254 = vadd.f32 %v2007, %v2208
      %v2255 = vadd.f32 %v2008, %v2247
      %v2256 = vadd.f32 %v2009, %v2249
      %v2257 = vxor.u32 %v2253, 2147483648
      %v2258 = vmul.f32 %v2257, 1.442695
      %v2259 = vpow.pop %v2258
      %v2260 = vadd.f32 %v2259, 1.0
      %v2261 = vrcp.pop %v2260
      %v2262 = vmul.f32 1.0, %v2261
      %v2263 = vxor.u32 %v2254, 2147483648
      %v2264 = vmul.f32 %v2263, 1.442695
      %v2265 = vpow.pop %v2264
      %v2266 = vadd.f32 %v2265, 1.0
      %v2267 = vrcp.pop %v2266
      %v2268 = vmul.f32 1.0, %v2267
      %v2269 = vtanh.pop %v2255
      %v2270 = vxor.u32 %v2256, 2147483648
      %v2271 = vmul.f32 %v2270, 1.442695
      %v2272 = vpow.pop %v2271
      %v2273 = vadd.f32 %v2272, 1.0
      %v2274 = vrcp.pop %v2273
      %v2275 = vmul.f32 1.0, %v2274
      %v2276 = vmul.f32 %v2268, %v2000
      %v2277 = vmul.f32 %v2262, %v2269
      %v2278 = vadd.f32 %v2276, %v2277
      %v2279 = vtanh.pop %v2278
      %v2280 = vmul.f32 %v2275, %v2279
      %v2281 = vsel %vm1997, %v2280, %v1999
      %v2282 = vsel %vm1997, %v2278, %v2000
      %2283 = vst [vmem:[#allocation2] sm:$0xff] %v2281
      %2284 = vst [vmem:[#allocation3] sm:$0xff] %v2282
    $region100: #{tpu_custom_call.1} parent=1 // loop_footer
      %s1988 = sadd.s32 %s1986, 1
    $region101: #{tpu_custom_call.1} parent=1 // loop_footer_branch
      %1985 = sbr.rel target = $region97
    $region102: #{tpu_custom_call.1} parent=1 // loop_exit
      _
    %v2285 = vld [vmem:[#allocation2] sm:$0xff]
    %v2286 = vld [vmem:[%s12] sm:$0xff]
    %v2287 = vld [vmem:[%s12 + $0x8] sm:$0xff]
    %v2288 = vld [vmem:[%s12 + $0x10] sm:$0xff]
    %v2289 = vld [vmem:[%s12 + $0x18] sm:$0xff]
    %v2290 = vld [vmem:[%s12 + $0x20] sm:$0xff]
    %v2291 = vld [vmem:[%s12 + $0x28] sm:$0xff]
    %v2292 = vld [vmem:[%s12 + $0x30] sm:$0xff]
    %v2293 = vld [vmem:[%s12 + $0x38] sm:$0xff]
    %v2294 = vld [vmem:[%s12 + $0x40] sm:$0xff]
    %v2295 = vld [vmem:[%s12 + $0x48] sm:$0xff]
    %v2296 = vld [vmem:[%s12 + $0x50] sm:$0xff]
    %v2297 = vld [vmem:[%s12 + $0x58] sm:$0xff]
    %v2298 = vld [vmem:[%s12 + $0x60] sm:$0xff]
    %v2299 = vld [vmem:[%s12 + $0x68] sm:$0xff]
    %v2300 = vld [vmem:[%s12 + $0x70] sm:$0xff]
    %v2301 = vld [vmem:[%s12 + $0x78] sm:$0xff]
    %v2302 = vld [vmem:[%s13] sm:$0x1]
    %v2304 = vlaneseq
    %v2305 = vshrl.u32 %v2304, 7
    %v2306 = vsub.s32 0, %v2305
    %v2307 = vrot.slane %v2302, %v2306
    %2309 = vmatprep.subr.mxu0 0.0
    %2310 = vmatpush1.msra.mxu0 %v2286
    %2311 = vmatprep.subr.mxu0 0.0
    %2312 = vmatpush1.msra.mxu0 %v2287
    %2313 = vmatprep.subr.mxu0 0.0
    %2314 = vmatpush1.msra.mxu0 %v2288
    %2315 = vmatprep.subr.mxu0 0.0
    %2316 = vmatpush1.msra.mxu0 %v2289
    %2317 = vmatprep.subr.mxu0 0.0
    %2318 = vmatpush1.msra.mxu0 %v2290
    %2319 = vmatprep.subr.mxu0 0.0
    %2320 = vmatpush1.msra.mxu0 %v2291
    %2321 = vmatprep.subr.mxu0 0.0
    %2322 = vmatpush1.msra.mxu0 %v2292
    %2323 = vmatprep.subr.mxu0 0.0
    %2324 = vmatpush1.msra.mxu0 %v2293
    %2325 = vmatprep.subr.mxu0 0.0
    %2326 = vmatpush1.msra.mxu0 %v2294
    %2327 = vmatprep.subr.mxu0 0.0
    %2328 = vmatpush1.msra.mxu0 %v2295
    %2329 = vmatprep.subr.mxu0 0.0
    %2330 = vmatpush1.msra.mxu0 %v2296
    %2331 = vmatprep.subr.mxu0 0.0
    %2332 = vmatpush1.msra.mxu0 %v2297
    %2333 = vmatprep.subr.mxu0 0.0
    %2334 = vmatpush1.msra.mxu0 %v2298
    %2335 = vmatprep.subr.mxu0 0.0
    %2336 = vmatpush1.msra.mxu0 %v2299
    %2337 = vmatprep.subr.mxu0 0.0
    %2338 = vmatpush1.msra.mxu0 %v2300
    %2339 = vmatprep.subr.mxu0 0.0
    %2340 = vmatpush1.msra.mxu0 %v2301
    %2341 = vmatprep.subr.mxu0 0.0
    %2342 = vmatpush1.msra.mxu0 0.0
    %2343 = vmatprep.subr.mxu0 0.0
    %2344 = vmatpush1.msra.mxu0 0.0
    %2345 = vmatprep.subr.mxu0 0.0
    %2346 = vmatpush1.msra.mxu0 0.0
    %2347 = vmatprep.subr.mxu0 0.0
    %2348 = vmatpush1.msra.mxu0 0.0
    %2349 = vmatprep.subr.mxu0 0.0
    %2350 = vmatpush1.msra.mxu0 0.0
    %2351 = vmatprep.subr.mxu0 0.0
    %2352 = vmatpush1.msra.mxu0 0.0
    %2353 = vmatprep.subr.mxu0 0.0
    %2354 = vmatpush1.msra.mxu0 0.0
    %2355 = vmatprep.subr.mxu0 0.0
    %2356 = vmatpush1.msra.mxu0 0.0
    %2357 = vmatprep.subr.mxu0 0.0
    %2358 = vmatpush1.msra.mxu0 0.0
    %2359 = vmatprep.subr.mxu0 0.0
    %2360 = vmatpush1.msra.mxu0 0.0
    %2361 = vmatprep.subr.mxu0 0.0
    %2362 = vmatpush1.msra.mxu0 0.0
    %2363 = vmatprep.subr.mxu0 0.0
    %2364 = vmatpush1.msra.mxu0 0.0
    %2365 = vmatprep.subr.mxu0 0.0
    %2366 = vmatpush1.msra.mxu0 0.0
    %2367 = vmatprep.subr.mxu0 0.0
    %2368 = vmatpush1.msra.mxu0 0.0
    %2369 = vmatprep.subr.mxu0 0.0
    %2370 = vmatpush1.msra.mxu0 0.0
    %2371 = vmatprep.subr.mxu0 0.0
    %2372 = vmatpush1.msra.mxu0 0.0
    %2373 = vmatprep.mubr.f32.mxu0 0.0
    %2374 = vmatmul.mubr.f32.gmra.mrb[0].mxu0 %v2285
    %v2375 = vpop.f32.mrb[0].mxu0
    %v2376 = vadd.f32 %v2307, %v2375
    %v2377 = vpop.f32.mrb[0].mxu0
    %2378 = vdwg.mxu0
    %v2379 = vld [vmem:[%s14] sm:$0xff]
    %v2380 = vld [vmem:[%s14 + $0x8] sm:$0xff]
    %v2381 = vld [vmem:[%s14 + $0x10] sm:$0xff]
    %v2382 = vld [vmem:[%s14 + $0x18] sm:$0xff]
    %vm2383 = vcmask 261120
    %v2385 = vsel %vm2383, %v2376, 0
    %2387 = vmatprep.subr.mxu0 0.0
    %2388 = vmatpush1.msra.mxu0 %v2379
    %2389 = vmatprep.subr.mxu0 0.0
    %2390 = vmatpush1.msra.mxu0 %v2380
    %2391 = vmatprep.subr.mxu0 0.0
    %2392 = vmatpush1.msra.mxu0 %v2381
    %2393 = vmatprep.subr.mxu0 0.0
    %2394 = vmatpush1.msra.mxu0 %v2382
    %2395 = vmatprep.subr.mxu0 0.0
    %2396 = vmatpush1.msra.mxu0 0.0
    %2397 = vmatprep.subr.mxu0 0.0
    %2398 = vmatpush1.msra.mxu0 0.0
    %2399 = vmatprep.subr.mxu0 0.0
    %2400 = vmatpush1.msra.mxu0 0.0
    %2401 = vmatprep.subr.mxu0 0.0
    %2402 = vmatpush1.msra.mxu0 0.0
    %2403 = vmatprep.subr.mxu0 0.0
    %2404 = vmatpush1.msra.mxu0 0.0
    %2405 = vmatprep.subr.mxu0 0.0
    %2406 = vmatpush1.msra.mxu0 0.0
    %2407 = vmatprep.subr.mxu0 0.0
    %2408 = vmatpush1.msra.mxu0 0.0
    %2409 = vmatprep.subr.mxu0 0.0
    %2410 = vmatpush1.msra.mxu0 0.0
    %2411 = vmatprep.subr.mxu0 0.0
    %2412 = vmatpush1.msra.mxu0 0.0
    %2413 = vmatprep.subr.mxu0 0.0
    %2414 = vmatpush1.msra.mxu0 0.0
    %2415 = vmatprep.subr.mxu0 0.0
    %2416 = vmatpush1.msra.mxu0 0.0
    %2417 = vmatprep.subr.mxu0 0.0
    %2418 = vmatpush1.msra.mxu0 0.0
    %2419 = vmatprep.subr.mxu0 0.0
    %2420 = vmatpush1.msra.mxu0 0.0
    %2421 = vmatprep.subr.mxu0 0.0
    %2422 = vmatpush1.msra.mxu0 0.0
    %2423 = vmatprep.subr.mxu0 0.0
    %2424 = vmatpush1.msra.mxu0 0.0
    %2425 = vmatprep.subr.mxu0 0.0
    %2426 = vmatpush1.msra.mxu0 0.0
    %2427 = vmatprep.subr.mxu0 0.0
    %2428 = vmatpush1.msra.mxu0 0.0
    %2429 = vmatprep.subr.mxu0 0.0
    %2430 = vmatpush1.msra.mxu0 0.0
    %2431 = vmatprep.subr.mxu0 0.0
    %2432 = vmatpush1.msra.mxu0 0.0
    %2433 = vmatprep.subr.mxu0 0.0
    %2434 = vmatpush1.msra.mxu0 0.0
    %2435 = vmatprep.subr.mxu0 0.0
    %2436 = vmatpush1.msra.mxu0 0.0
    %2437 = vmatprep.subr.mxu0 0.0
    %2438 = vmatpush1.msra.mxu0 0.0
    %2439 = vmatprep.subr.mxu0 0.0
    %2440 = vmatpush1.msra.mxu0 0.0
    %2441 = vmatprep.subr.mxu0 0.0
    %2442 = vmatpush1.msra.mxu0 0.0
    %2443 = vmatprep.subr.mxu0 0.0
    %2444 = vmatpush1.msra.mxu0 0.0
    %2445 = vmatprep.subr.mxu0 0.0
    %2446 = vmatpush1.msra.mxu0 0.0
    %2447 = vmatprep.subr.mxu0 0.0
    %2448 = vmatpush1.msra.mxu0 0.0
    %2449 = vmatprep.subr.mxu0 0.0
    %2450 = vmatpush1.msra.mxu0 0.0
    %2451 = vmatprep.mubr.f32.mxu0 0.0
    %2452 = vmatmul.mubr.f32.gmra.mrb[0].mxu0 %v2385
    %v2453 = vpop.f32.mrb[0].mxu0
    %v2454 = vadd.f32 0.0, %v2453
    %v2455 = vpop.f32.mrb[0].mxu0
    %2456 = vdwg.mxu0
    %vm2457 = vcmask 130048
    %v2458 = vsel %vm2457, %v2454, -inf
    %2459 = vmax.xlane.f32.xlu0 %v2458
    %v2460 = vpop.xlane.xlu0 %2459
    %v2461 = vsub.f32 %v2454, %v2460
    %v2462 = vmul.f32 %v2461, 1.442695
    %v2463 = vpow.pop %v2462
    %v2464 = vsel %vm2457, %v2463, 0.0
    %2465 = vadd.xlane.f32.xlu0 %v2464
    %v2466 = vpop.xlane.xlu0 %2465
    %v2467 = vrcp.pop %v2466
    %v2468 = vmul.f32 %v2463, %v2467
    %2469 = vst.msk [vmem:[#allocation16] sm:$0xff] %vm2383, %v2376
    %2470 = vst.msk [vmem:[#allocation17] sm:$0xff] %vm2457, %v2468
    // Predicated region
    $region103: #{tpu_custom_call.1} parent=1 // pred_check
      _
    $region104: #{tpu_custom_call.1} parent=1 // pred_check_branch
      %2472 = sbr.rel (0) target = $region106
    $region105: #{tpu_custom_call.1} parent=1 // pred_region
      %s2474 = ssub.s32 128, 128
      %2475 = vsyncadd [#allocation9], %s2474
      %s2477 = sshll.u32 [#allocation16], 4
      %s2478 = int_to_ptr.vmem [resolvable:$true] %s2477
      %2480 = dma.vmem_to_hbm [thread:$0]  %s2478, 128, %s15, [#allocation9]
    $region106: #{tpu_custom_call.1} parent=1 // pred_fallthru
      _
    // Predicated region
    $region107: #{tpu_custom_call.1} parent=1 // pred_check
      _
    $region108: #{tpu_custom_call.1} parent=1 // pred_check_branch
      %2482 = sbr.rel (0) target = $region110
    $region109: #{tpu_custom_call.1} parent=1 // pred_region
      %s2484 = ssub.s32 128, 128
      %2485 = vsyncadd [#allocation18], %s2484
      %s2487 = sshll.u32 [#allocation17], 4
      %s2488 = int_to_ptr.vmem [resolvable:$true] %s2487
      %2490 = dma.vmem_to_hbm [thread:$0]  %s2488, 128, %s16, [#allocation18]
    $region110: #{tpu_custom_call.1} parent=1 // pred_fallthru
      _
    // Predicated region
    $region111: #{tpu_custom_call.1} parent=1 // pred_check
      _
    $region112: #{tpu_custom_call.1} parent=1 // pred_check_branch
      %2492 = sbr.rel (0) target = $region114
    $region113: #{tpu_custom_call.1} parent=1 // pred_region
      %2493 = dma.done [#allocation9], 128
    $region114: #{tpu_custom_call.1} parent=1 // pred_fallthru
      _
    // Predicated region
    $region115: #{tpu_custom_call.1} parent=1 // pred_check
      _
    $region116: #{tpu_custom_call.1} parent=1 // pred_check_branch
      %2495 = sbr.rel (0) target = $region118
    $region117: #{tpu_custom_call.1} parent=1 // pred_region
      %2496 = dma.done [#allocation18], 128
    $region118: #{tpu_custom_call.1} parent=1 // pred_fallthru
      _
    %2497 = vsyncpa [#allocation8], 1
    %2498 = vsyncpa [#allocation11], 1
    %2499 = vsyncpa [#allocation14], 1
    %2500 = vsyncpa [#allocation9], 1
    %2501 = vsyncpa [#allocation18], 1

</llo_original>
